<compile_context>
chip_gen: v7x
topology: tpu7x:2x2x1
jax: 0.10.0
libtpu: 0.0.40
codegen_flags: <defaults>
</compile_context>

<pallas_src>
import math

import jax
import jax.numpy as jnp
from jax.experimental import pallas as pl
from jax.experimental.pallas import tpu as pltpu


def _make_kernel(n_head: int, head_dim: int, d_model: int, eps: float = 1e-5):
    def kernel(t_ref, m_ref, wq_ref, bq_ref, wkv_ref, bkv_ref, g_ref, b2_ref,
               o_ref, q_scr, m_scr, l_scr, acc_scr):
        ki = pl.program_id(2)

        @pl.when(ki == 0)
        def _init():
            # Project Q once per (batch, q-tile); 1/sqrt(hd) is already folded
            # into wq/bq on the host.
            t = t_ref[0]                                              # (tq, D)
            q = jnp.dot(t, wq_ref[...], preferred_element_type=jnp.float32)
            q = q + bq_ref[...]
            q_scr[...] = q.astype(q_scr.dtype)
            m_scr[...] = jnp.full_like(m_scr, -jnp.inf)
            l_scr[...] = jnp.zeros_like(l_scr)
            acc_scr[...] = jnp.zeros_like(acc_scr)

        # K/V projection for this memory tile: one wide MXU matmul (D -> 2D),
        # operands kept in the input dtype, f32 accumulation.
        mem = m_ref[0]                                                # (tk, D)
        kv = jnp.dot(mem, wkv_ref[...], preferred_element_type=jnp.float32)
        kv = (kv + bkv_ref[...]).astype(mem.dtype)                    # (tk, 2D)
        q = q_scr[...]                                                # (tq, D)

        # Flash-style online softmax over the kv grid axis, per head.
        # Heads are static lane slices -- no (L, H, hd) reshape/transposes.
        # NOTE: the QK^T / P@V contractions are head_dim wide; hd >= 128 is the
        # MXU-efficient regime (smaller hd under-utilizes the systolic array).
        for h in range(n_head):
            lo = h * head_dim
            q_h = q[:, lo:lo + head_dim]                              # (tq, hd)
            k_h = kv[:, lo:lo + head_dim]                             # (tk, hd)
            v_h = kv[:, d_model + lo:d_model + lo + head_dim]         # (tk, hd)

            s = jax.lax.dot_general(                                  # (tq, tk)
                q_h, k_h, (((1,), (1,)), ((), ())),
                preferred_element_type=jnp.float32)

            m_prev = m_scr[:, h:h + 1]                                # (tq, 1)
            m_new = jnp.maximum(m_prev, jnp.max(s, axis=-1, keepdims=True))
            alpha = jnp.exp(m_prev - m_new)
            p = jnp.exp(s - m_new)                                    # (tq, tk)
            l_scr[:, h:h + 1] = (alpha * l_scr[:, h:h + 1]
                                 + jnp.sum(p, axis=-1, keepdims=True))
            pv = jnp.dot(p.astype(v_h.dtype), v_h,
                         preferred_element_type=jnp.float32)          # (tq, hd)
            acc_scr[:, lo:lo + head_dim] = (
                alpha * acc_scr[:, lo:lo + head_dim] + pv)
            m_scr[:, h:h + 1] = m_new

        @pl.when(ki == pl.num_programs(2) - 1)
        def _finalize():
            # Normalize ctx (tq x D elements) once instead of the (H, tq, tk)
            # probability tensor.  approx=True would push this to the EUP slot
            # at slightly relaxed precision.
            inv_l = pl.reciprocal(l_scr[...], approx=False)           # (tq, H)
            for h in range(n_head):
                lo = h * head_dim
                acc_scr[:, lo:lo + head_dim] = (
                    acc_scr[:, lo:lo + head_dim] * inv_l[:, h:h + 1])
            ctx = acc_scr[...]                                        # (tq, D)

            # TODO(synk): attention / output dropout are identity (inference).
            x = ctx + t_ref[0].astype(jnp.float32)                    # residual
            mean = jnp.mean(x, axis=-1, keepdims=True)
            cen = x - mean
            var = jnp.mean(cen * cen, axis=-1, keepdims=True)
            y = cen * jax.lax.rsqrt(var + eps)
            y = y * g_ref[...] + b2_ref[...]
            o_ref[0] = y.astype(o_ref.dtype)

    return kernel


def _choose_tile(length: int, d_model: int, pref: int) -> int:
    """Largest tile <= pref that divides `length` and keeps (8,128) tileability."""
    if length <= pref or d_model % 128 != 0:
        return length
    t = max(8, (pref // 8) * 8)
    while t >= 8:
        if length % t == 0:
            return t
        t -= 8
    return length


def multi_head_cross_attn(target, memory, params, n_head, *, tq=None, tk=None,
                          vmem_limit_bytes=None):
    """target: (B, T, D), memory: (B, M, D) -> (B, T, D).

    params = (wq, bq, wk, bk, wv, bv, gamma, beta) in PyTorch layout
    (weights are (out_features, in_features))."""
    B, T, D = target.shape
    _, M, _ = memory.shape
    head_dim = D // n_head
    assert head_dim * n_head == D, "d_model must be divisible by n_head"

    wq, bq, wk, bk, wv, bv, gamma, beta = params
    dt = target.dtype
    scale = 1.0 / math.sqrt(head_dim)

    # ---- host-side (loop-invariant) weight prep ----
    # Transpose to (in, out) order so the kernel does x @ W, fold the softmax
    # scale into Wq/bq, and fuse Wk/Wv into one slab (single resident buffer).
    wq_t = (wq.T * scale).astype(dt)                                  # (D, D)
    bq_s = (bq * scale).reshape(1, D).astype(jnp.float32)
    wkv_t = jnp.concatenate([wk.T, wv.T], axis=1).astype(dt)          # (D, 2D)
    bkv = jnp.concatenate([bk, bv]).reshape(1, 2 * D).astype(jnp.float32)
    g2 = gamma.reshape(1, D).astype(jnp.float32)
    be2 = beta.reshape(1, D).astype(jnp.float32)

    tq = _choose_tile(T, D, tq or 256)
    tk = _choose_tile(M, D, tk or 512)
    nq, nk = T // tq, M // tk

    kernel = _make_kernel(n_head, head_dim, D)

    grid_spec = pltpu.PrefetchScalarGridSpec(
        num_scalar_prefetch=0,
        grid=(B, nq, nk),
        in_specs=[
            pl.BlockSpec((1, tq, D), lambda b, qi, ki: (b, qi, 0)),   # target
            pl.BlockSpec((1, tk, D), lambda b, qi, ki: (b, ki, 0)),   # memory
            pl.BlockSpec((D, D), lambda b, qi, ki: (0, 0)),           # Wq (scaled)
            pl.BlockSpec((1, D), lambda b, qi, ki: (0, 0)),           # bq (scaled)
            pl.BlockSpec((D, 2 * D), lambda b, qi, ki: (0, 0)),       # [Wk|Wv]
            pl.BlockSpec((1, 2 * D), lambda b, qi, ki: (0, 0)),       # [bk|bv]
            pl.BlockSpec((1, D), lambda b, qi, ki: (0, 0)),           # gamma
            pl.BlockSpec((1, D), lambda b, qi, ki: (0, 0)),           # beta
        ],
        out_specs=pl.BlockSpec((1, tq, D), lambda b, qi, ki: (b, qi, 0)),
        scratch_shapes=[
            pltpu.VMEM((tq, D), dt),                 # cached projected Q
            pltpu.VMEM((tq, n_head), jnp.float32),   # running max m
            pltpu.VMEM((tq, n_head), jnp.float32),   # running sum l
            pltpu.VMEM((tq, D), jnp.float32),        # f32 context accumulator
        ],
    )

    return pl.pallas_call(
        kernel,
        out_shape=jax.ShapeDtypeStruct((B, T, D), dt),
        grid_spec=grid_spec,
        compiler_params=pltpu.CompilerParams(
            dimension_semantics=("parallel", "parallel", "arbitrary"),
            vmem_limit_bytes=vmem_limit_bytes),
    )(target, memory, wq_t, bq_s, wkv_t, bkv, g2, be2)


def _reference(target, memory, params, n_head):
    """Pure-JAX reference mirroring the PyTorch forward (dropout = identity)."""
    wq, bq, wk, bk, wv, bv, gamma, beta = params
    B, T, D = target.shape
    M = memory.shape[1]
    hd = D // n_head
    q = target @ wq.T + bq
    k = memory @ wk.T + bk
    v = memory @ wv.T + bv
    q = q.reshape(B, T, n_head, hd).transpose(0, 2, 1, 3)
    k = k.reshape(B, M, n_head, hd).transpose(0, 2, 1, 3)
    v = v.reshape(B, M, n_head, hd).transpose(0, 2, 1, 3)
    attn = jnp.einsum("bhtd,bhmd->bhtm", q, k) / math.sqrt(hd)
    attn = jax.nn.softmax(attn, axis=-1)
    ctx = jnp.einsum("bhtm,bhmd->bhtd", attn, v)
    ctx = ctx.transpose(0, 2, 1, 3).reshape(B, T, D)
    x = ctx + target
    mean = jnp.mean(x, axis=-1, keepdims=True)
    var = jnp.mean((x - mean) ** 2, axis=-1, keepdims=True)
    return (x - mean) / jnp.sqrt(var + 1e-5) * gamma + beta


if __name__ == "__main__":
    def _make_case(key, B, T, M, D, H, random_ln=False):
        ks = jax.random.split(key, 10)
        target = jax.random.normal(ks[0], (B, T, D), jnp.float32)
        memory = jax.random.normal(ks[1], (B, M, D), jnp.float32)
        s = 1.0 / math.sqrt(D)
        wq = jax.random.uniform(ks[2], (D, D), jnp.float32, -s, s)
        bq = jax.random.uniform(ks[3], (D,), jnp.float32, -s, s)
        wk = jax.random.uniform(ks[4], (D, D), jnp.float32, -s, s)
        bk = jax.random.uniform(ks[5], (D,), jnp.float32, -s, s)
        wv = jax.random.uniform(ks[6], (D, D), jnp.float32, -s, s)
        bv = jax.random.uniform(ks[7], (D,), jnp.float32, -s, s)
        if random_ln:
            gamma = jax.random.uniform(ks[8], (D,), jnp.float32, 0.5, 1.5)
            beta = jax.random.uniform(ks[9], (D,), jnp.float32, -0.5, 0.5)
        else:
            gamma = jnp.ones((D,), jnp.float32)
            beta = jnp.zeros((D,), jnp.float32)
        return target, memory, (wq, bq, wk, bk, wv, bv, gamma, beta), H

    key = jax.random.PRNGKey(0)
    k1, k2 = jax.random.split(key)

    # Case 1: tiny module-like shapes (single kv tile, full-extent blocks).
    t1, m1, p1, h1 = _make_case(k1, B=2, T=8, M=8, D=32, H=4)
    out1 = jax.block_until_ready(multi_head_cross_attn(t1, m1, p1, h1))
    ref1 = _reference(t1, m1, p1, h1)
    assert jnp.allclose(out1, ref1, atol=2e-4, rtol=2e-4), "case 1 mismatch"

    # Case 2: exercises the query-tile + flash-style kv-streaming path
    # (grid = (1, 2, 2) with tq=8, tk=16 and lane-aligned D=128).
    t2, m2, p2, h2 = _make_case(k2, B=1, T=16, M=32, D=128, H=8, random_ln=True)
    out2 = jax.block_until_ready(
        multi_head_cross_attn(t2, m2, p2, h2, tq=8, tk=16))
    ref2 = _reference(t2, m2, p2, h2)
    assert jnp.allclose(out2, ref2, atol=2e-4, rtol=2e-4), "case 2 mismatch"

    print("KERNEL_OK")
</pallas_src>

<mosaic_0001>
module attributes {stable_mosaic.version = 11 : i64} {
  func.func @kernel(%arg0: i32, %arg1: i32, %arg2: i32, %arg3: memref<1x8x32xf32, #tpu.memory_space<vmem>>, %arg4: memref<1x8x32xf32, #tpu.memory_space<vmem>>, %arg5: memref<32x32xf32, #tpu.memory_space<vmem>>, %arg6: memref<1x32xf32, #tpu.memory_space<vmem>>, %arg7: memref<32x64xf32, #tpu.memory_space<vmem>>, %arg8: memref<1x64xf32, #tpu.memory_space<vmem>>, %arg9: memref<1x32xf32, #tpu.memory_space<vmem>>, %arg10: memref<1x32xf32, #tpu.memory_space<vmem>>, %arg11: memref<1x8x32xf32, #tpu.memory_space<vmem>>, %arg12: memref<8x32xf32, #tpu.memory_space<vmem>>, %arg13: memref<8x4xf32, #tpu.memory_space<vmem>>, %arg14: memref<8x4xf32, #tpu.memory_space<vmem>>, %arg15: memref<8x32xf32, #tpu.memory_space<vmem>>) attributes {dimension_semantics = [#tpu.dimension_semantics<parallel>, #tpu.dimension_semantics<parallel>, #tpu.dimension_semantics<arbitrary>], iteration_bounds = array<i64: 2, 1, 1>, scalar_prefetch = 0 : i64, scratch_operands = 4 : i64, tpu.core_type = #tpu.core_type<tc>, window_params = [{transform_indices = @transform_0, window_bounds = array<i64: 1, 8, 32>}, {transform_indices = @transform_1, window_bounds = array<i64: 1, 8, 32>}, {pipeline_mode = #tpu.pipeline_mode<synchronous>, transform_indices = @transform_2, window_bounds = array<i64: 32, 32>}, {pipeline_mode = #tpu.pipeline_mode<synchronous>, transform_indices = @transform_3, window_bounds = array<i64: 1, 32>}, {pipeline_mode = #tpu.pipeline_mode<synchronous>, transform_indices = @transform_4, window_bounds = array<i64: 32, 64>}, {pipeline_mode = #tpu.pipeline_mode<synchronous>, transform_indices = @transform_5, window_bounds = array<i64: 1, 64>}, {pipeline_mode = #tpu.pipeline_mode<synchronous>, transform_indices = @transform_6, window_bounds = array<i64: 1, 32>}, {pipeline_mode = #tpu.pipeline_mode<synchronous>, transform_indices = @transform_7, window_bounds = array<i64: 1, 32>}, {transform_indices = @transform_8, window_bounds = array<i64: 1, 8, 32>}]} {
    %c0_i32 = arith.constant 0 : i32
    %0 = arith.cmpi eq, %arg2, %c0_i32 : i32
    %1 = arith.extui %0 : i1 to i32
    %c0_i32_0 = arith.constant 0 : i32
    %2 = arith.cmpi ne, %1, %c0_i32_0 : i32
    scf.if %2 {
      %c0_69 = arith.constant 0 : index
      %c0_70 = arith.constant 0 : index
      %c0_71 = arith.constant 0 : index
      %118 = vector.load %arg3[%c0_69, %c0_70, %c0_71] : memref<1x8x32xf32, #tpu.memory_space<vmem>>, vector<1x8x32xf32>
      %119 = vector.shape_cast %118 : vector<1x8x32xf32> to vector<8x32xf32>
      %c0_72 = arith.constant 0 : index
      %c0_73 = arith.constant 0 : index
      %120 = vector.load %arg5[%c0_72, %c0_73] : memref<32x32xf32, #tpu.memory_space<vmem>>, vector<32x32xf32>
      %cst_74 = arith.constant dense<0.000000e+00> : vector<8x32xf32>
      %121 = tpu.matmul %119, %120, %cst_74 {dimension_numbers = #tpu.dot_dimension_numbers<[1], [0], [0], [1], [0, 0, 1, 1], [], []>} : vector<8x32xf32>, vector<32x32xf32>, vector<8x32xf32> -> vector<8x32xf32>
      %c0_75 = arith.constant 0 : index
      %c0_76 = arith.constant 0 : index
      %122 = vector.load %arg6[%c0_75, %c0_76] : memref<1x32xf32, #tpu.memory_space<vmem>>, vector<1x32xf32>
      %123 = vector.broadcast %122 : vector<1x32xf32> to vector<8x32xf32>
      %124 = arith.addf %121, %123 : vector<8x32xf32>
      %c0_77 = arith.constant 0 : index
      %c0_78 = arith.constant 0 : index
      %125 = vector.load %arg12[%c0_77, %c0_78] : memref<8x32xf32, #tpu.memory_space<vmem>>, vector<8x32xf32>
      tpu.vector_store %arg12[%c0_77, %c0_78], %124 {strides = array<i32>} : memref<8x32xf32, #tpu.memory_space<vmem>>, vector<8x32xf32>,
      %cst_79 = arith.constant 0xFF800000 : f32
      %126 = vector.broadcast %cst_79 : f32 to vector<8x4xf32>
      %c0_80 = arith.constant 0 : index
      %c0_81 = arith.constant 0 : index
      %127 = vector.load %arg13[%c0_80, %c0_81] : memref<8x4xf32, #tpu.memory_space<vmem>>, vector<8x4xf32>
      tpu.vector_store %arg13[%c0_80, %c0_81], %126 {strides = array<i32>} : memref<8x4xf32, #tpu.memory_space<vmem>>, vector<8x4xf32>,
      %cst_82 = arith.constant 0.000000e+00 : f32
      %128 = vector.broadcast %cst_82 : f32 to vector<8x4xf32>
      %c0_83 = arith.constant 0 : index
      %c0_84 = arith.constant 0 : index
      %129 = vector.load %arg14[%c0_83, %c0_84] : memref<8x4xf32, #tpu.memory_space<vmem>>, vector<8x4xf32>
      tpu.vector_store %arg14[%c0_83, %c0_84], %128 {strides = array<i32>} : memref<8x4xf32, #tpu.memory_space<vmem>>, vector<8x4xf32>,
      %cst_85 = arith.constant 0.000000e+00 : f32
      %130 = vector.broadcast %cst_85 : f32 to vector<8x32xf32>
      %c0_86 = arith.constant 0 : index
      %c0_87 = arith.constant 0 : index
      %131 = vector.load %arg15[%c0_86, %c0_87] : memref<8x32xf32, #tpu.memory_space<vmem>>, vector<8x32xf32>
      tpu.vector_store %arg15[%c0_86, %c0_87], %130 {strides = array<i32>} : memref<8x32xf32, #tpu.memory_space<vmem>>, vector<8x32xf32>,
    } else {
    }
    %c0 = arith.constant 0 : index
    %c0_1 = arith.constant 0 : index
    %c0_2 = arith.constant 0 : index
    %3 = vector.load %arg4[%c0, %c0_1, %c0_2] : memref<1x8x32xf32, #tpu.memory_space<vmem>>, vector<1x8x32xf32>
    %4 = vector.shape_cast %3 : vector<1x8x32xf32> to vector<8x32xf32>
    %c0_3 = arith.constant 0 : index
    %c0_4 = arith.constant 0 : index
    %5 = vector.load %arg7[%c0_3, %c0_4] : memref<32x64xf32, #tpu.memory_space<vmem>>, vector<32x64xf32>
    %cst = arith.constant dense<0.000000e+00> : vector<8x64xf32>
    %6 = tpu.matmul %4, %5, %cst {dimension_numbers = #tpu.dot_dimension_numbers<[1], [0], [0], [1], [0, 0, 1, 1], [], []>} : vector<8x32xf32>, vector<32x64xf32>, vector<8x64xf32> -> vector<8x64xf32>
    %c0_5 = arith.constant 0 : index
    %c0_6 = arith.constant 0 : index
    %7 = vector.load %arg8[%c0_5, %c0_6] : memref<1x64xf32, #tpu.memory_space<vmem>>, vector<1x64xf32>
    %8 = vector.broadcast %7 : vector<1x64xf32> to vector<8x64xf32>
    %9 = arith.addf %6, %8 : vector<8x64xf32>
    %c0_7 = arith.constant 0 : index
    %c0_8 = arith.constant 0 : index
    %10 = vector.load %arg12[%c0_7, %c0_8] : memref<8x32xf32, #tpu.memory_space<vmem>>, vector<8x32xf32>
    %11 = vector.extract_strided_slice %10 {offsets = [0, 0], sizes = [8, 8], strides = [1, 1]} : vector<8x32xf32> to vector<8x8xf32>
    %12 = vector.extract_strided_slice %9 {offsets = [0, 0], sizes = [8, 8], strides = [1, 1]} : vector<8x64xf32> to vector<8x8xf32>
    %13 = vector.extract_strided_slice %9 {offsets = [0, 32], sizes = [8, 8], strides = [1, 1]} : vector<8x64xf32> to vector<8x8xf32>
    %cst_9 = arith.constant dense<0.000000e+00> : vector<8x8xf32>
    %14 = tpu.matmul %11, %12, %cst_9 {dimension_numbers = #tpu.dot_dimension_numbers<[1], [1], [0], [0], [0, 0, 1, 0], [], []>} : vector<8x8xf32>, vector<8x8xf32>, vector<8x8xf32> -> vector<8x8xf32>
    %c0_10 = arith.constant 0 : index
    %c0_11 = arith.constant 0 : index
    %15 = vector.load %arg13[%c0_10, %c0_11] : memref<8x4xf32, #tpu.memory_space<vmem>>, vector<8x1xf32>
    %cst_12 = arith.constant dense<0xFF800000> : vector<8xf32>
    %16 = vector.multi_reduction <maximumf>, %14, %cst_12 [1] : vector<8x8xf32> to vector<8xf32>
    %17 = vector.shape_cast %16 : vector<8xf32> to vector<8x1xf32>
    %18 = arith.maximumf %15, %17 : vector<8x1xf32>
    %19 = arith.subf %15, %18 : vector<8x1xf32>
    %20 = math.exp %19 : vector<8x1xf32>
    %21 = vector.broadcast %18 : vector<8x1xf32> to vector<8x8xf32>
    %22 = arith.subf %14, %21 : vector<8x8xf32>
    %23 = math.exp %22 : vector<8x8xf32>
    %c0_13 = arith.constant 0 : index
    %c0_14 = arith.constant 0 : index
    %24 = vector.load %arg14[%c0_13, %c0_14] : memref<8x4xf32, #tpu.memory_space<vmem>>, vector<8x1xf32>
    %25 = arith.mulf %20, %24 : vector<8x1xf32>
    %cst_15 = arith.constant dense<0.000000e+00> : vector<8xf32>
    %26 = vector.multi_reduction <add>, %23, %cst_15 [1] : vector<8x8xf32> to vector<8xf32>
    %27 = vector.shape_cast %26 : vector<8xf32> to vector<8x1xf32>
    %28 = arith.addf %25, %27 : vector<8x1xf32>
    %c0_16 = arith.constant 0 : index
    %c0_17 = arith.constant 0 : index
    %29 = vector.load %arg14[%c0_16, %c0_17] : memref<8x4xf32, #tpu.memory_space<vmem>>, vector<8x1xf32>
    tpu.vector_store %arg14[%c0_16, %c0_17], %28 {strides = array<i32>} : memref<8x4xf32, #tpu.memory_space<vmem>>, vector<8x1xf32>,
    %cst_18 = arith.constant dense<0.000000e+00> : vector<8x8xf32>
    %30 = tpu.matmul %23, %13, %cst_18 {dimension_numbers = #tpu.dot_dimension_numbers<[1], [0], [0], [1], [0, 0, 1, 1], [], []>} : vector<8x8xf32>, vector<8x8xf32>, vector<8x8xf32> -> vector<8x8xf32>
    %c0_19 = arith.constant 0 : index
    %c0_20 = arith.constant 0 : index
    %31 = vector.load %arg15[%c0_19, %c0_20] : memref<8x32xf32, #tpu.memory_space<vmem>>, vector<8x8xf32>
    %32 = vector.broadcast %20 : vector<8x1xf32> to vector<8x8xf32>
    %33 = arith.mulf %32, %31 : vector<8x8xf32>
    %34 = arith.addf %33, %30 : vector<8x8xf32>
    %c0_21 = arith.constant 0 : index
    %c0_22 = arith.constant 0 : index
    %35 = vector.load %arg15[%c0_21, %c0_22] : memref<8x32xf32, #tpu.memory_space<vmem>>, vector<8x8xf32>
    tpu.vector_store %arg15[%c0_21, %c0_22], %34 {strides = array<i32>} : memref<8x32xf32, #tpu.memory_space<vmem>>, vector<8x8xf32>,
    %c0_23 = arith.constant 0 : index
    %c0_24 = arith.constant 0 : index
    %36 = vector.load %arg13[%c0_23, %c0_24] : memref<8x4xf32, #tpu.memory_space<vmem>>, vector<8x1xf32>
    tpu.vector_store %arg13[%c0_23, %c0_24], %18 {strides = array<i32>} : memref<8x4xf32, #tpu.memory_space<vmem>>, vector<8x1xf32>,
    %37 = vector.extract_strided_slice %10 {offsets = [0, 8], sizes = [8, 8], strides = [1, 1]} : vector<8x32xf32> to vector<8x8xf32>
    %38 = vector.extract_strided_slice %9 {offsets = [0, 8], sizes = [8, 8], strides = [1, 1]} : vector<8x64xf32> to vector<8x8xf32>
    %39 = vector.extract_strided_slice %9 {offsets = [0, 40], sizes = [8, 8], strides = [1, 1]} : vector<8x64xf32> to vector<8x8xf32>
    %cst_25 = arith.constant dense<0.000000e+00> : vector<8x8xf32>
    %40 = tpu.matmul %37, %38, %cst_25 {dimension_numbers = #tpu.dot_dimension_numbers<[1], [1], [0], [0], [0, 0, 1, 0], [], []>} : vector<8x8xf32>, vector<8x8xf32>, vector<8x8xf32> -> vector<8x8xf32>
    %c0_26 = arith.constant 0 : index
    %c1 = arith.constant 1 : index
    %41 = vector.load %arg13[%c0_26, %c1] : memref<8x4xf32, #tpu.memory_space<vmem>>, vector<8x1xf32>
    %cst_27 = arith.constant dense<0xFF800000> : vector<8xf32>
    %42 = vector.multi_reduction <maximumf>, %40, %cst_27 [1] : vector<8x8xf32> to vector<8xf32>
    %43 = vector.shape_cast %42 : vector<8xf32> to vector<8x1xf32>
    %44 = arith.maximumf %41, %43 : vector<8x1xf32>
    %45 = arith.subf %41, %44 : vector<8x1xf32>
    %46 = math.exp %45 : vector<8x1xf32>
    %47 = vector.broadcast %44 : vector<8x1xf32> to vector<8x8xf32>
    %48 = arith.subf %40, %47 : vector<8x8xf32>
    %49 = math.exp %48 : vector<8x8xf32>
    %c0_28 = arith.constant 0 : index
    %c1_29 = arith.constant 1 : index
    %50 = vector.load %arg14[%c0_28, %c1_29] : memref<8x4xf32, #tpu.memory_space<vmem>>, vector<8x1xf32>
    %51 = arith.mulf %46, %50 : vector<8x1xf32>
    %cst_30 = arith.constant dense<0.000000e+00> : vector<8xf32>
    %52 = vector.multi_reduction <add>, %49, %cst_30 [1] : vector<8x8xf32> to vector<8xf32>
    %53 = vector.shape_cast %52 : vector<8xf32> to vector<8x1xf32>
    %54 = arith.addf %51, %53 : vector<8x1xf32>
    %c0_31 = arith.constant 0 : index
    %c1_32 = arith.constant 1 : index
    %55 = vector.load %arg14[%c0_31, %c1_32] : memref<8x4xf32, #tpu.memory_space<vmem>>, vector<8x1xf32>
    tpu.vector_store %arg14[%c0_31, %c1_32], %54 {strides = array<i32>} : memref<8x4xf32, #tpu.memory_space<vmem>>, vector<8x1xf32>,
    %cst_33 = arith.constant dense<0.000000e+00> : vector<8x8xf32>
    %56 = tpu.matmul %49, %39, %cst_33 {dimension_numbers = #tpu.dot_dimension_numbers<[1], [0], [0], [1], [0, 0, 1, 1], [], []>} : vector<8x8xf32>, vector<8x8xf32>, vector<8x8xf32> -> vector<8x8xf32>
    %c0_34 = arith.constant 0 : index
    %c8 = arith.constant 8 : index
    %57 = vector.load %arg15[%c0_34, %c8] : memref<8x32xf32, #tpu.memory_space<vmem>>, vector<8x8xf32>
    %58 = vector.broadcast %46 : vector<8x1xf32> to vector<8x8xf32>
    %59 = arith.mulf %58, %57 : vector<8x8xf32>
    %60 = arith.addf %59, %56 : vector<8x8xf32>
    %c0_35 = arith.constant 0 : index
    %c8_36 = arith.constant 8 : index
    %61 = vector.load %arg15[%c0_35, %c8_36] : memref<8x32xf32, #tpu.memory_space<vmem>>, vector<8x8xf32>
    tpu.vector_store %arg15[%c0_35, %c8_36], %60 {strides = array<i32>} : memref<8x32xf32, #tpu.memory_space<vmem>>, vector<8x8xf32>,
    %c0_37 = arith.constant 0 : index
    %c1_38 = arith.constant 1 : index
    %62 = vector.load %arg13[%c0_37, %c1_38] : memref<8x4xf32, #tpu.memory_space<vmem>>, vector<8x1xf32>
    tpu.vector_store %arg13[%c0_37, %c1_38], %44 {strides = array<i32>} : memref<8x4xf32, #tpu.memory_space<vmem>>, vector<8x1xf32>,
    %63 = vector.extract_strided_slice %10 {offsets = [0, 16], sizes = [8, 8], strides = [1, 1]} : vector<8x32xf32> to vector<8x8xf32>
    %64 = vector.extract_strided_slice %9 {offsets = [0, 16], sizes = [8, 8], strides = [1, 1]} : vector<8x64xf32> to vector<8x8xf32>
    %65 = vector.extract_strided_slice %9 {offsets = [0, 48], sizes = [8, 8], strides = [1, 1]} : vector<8x64xf32> to vector<8x8xf32>
    %cst_39 = arith.constant dense<0.000000e+00> : vector<8x8xf32>
    %66 = tpu.matmul %63, %64, %cst_39 {dimension_numbers = #tpu.dot_dimension_numbers<[1], [1], [0], [0], [0, 0, 1, 0], [], []>} : vector<8x8xf32>, vector<8x8xf32>, vector<8x8xf32> -> vector<8x8xf32>
    %c0_40 = arith.constant 0 : index
    %c2 = arith.constant 2 : index
    %67 = vector.load %arg13[%c0_40, %c2] : memref<8x4xf32, #tpu.memory_space<vmem>>, vector<8x1xf32>
    %cst_41 = arith.constant dense<0xFF800000> : vector<8xf32>
    %68 = vector.multi_reduction <maximumf>, %66, %cst_41 [1] : vector<8x8xf32> to vector<8xf32>
    %69 = vector.shape_cast %68 : vector<8xf32> to vector<8x1xf32>
    %70 = arith.maximumf %67, %69 : vector<8x1xf32>
    %71 = arith.subf %67, %70 : vector<8x1xf32>
    %72 = math.exp %71 : vector<8x1xf32>
    %73 = vector.broadcast %70 : vector<8x1xf32> to vector<8x8xf32>
    %74 = arith.subf %66, %73 : vector<8x8xf32>
    %75 = math.exp %74 : vector<8x8xf32>
    %c0_42 = arith.constant 0 : index
    %c2_43 = arith.constant 2 : index
    %76 = vector.load %arg14[%c0_42, %c2_43] : memref<8x4xf32, #tpu.memory_space<vmem>>, vector<8x1xf32>
    %77 = arith.mulf %72, %76 : vector<8x1xf32>
    %cst_44 = arith.constant dense<0.000000e+00> : vector<8xf32>
    %78 = vector.multi_reduction <add>, %75, %cst_44 [1] : vector<8x8xf32> to vector<8xf32>
    %79 = vector.shape_cast %78 : vector<8xf32> to vector<8x1xf32>
    %80 = arith.addf %77, %79 : vector<8x1xf32>
    %c0_45 = arith.constant 0 : index
    %c2_46 = arith.constant 2 : index
    %81 = vector.load %arg14[%c0_45, %c2_46] : memref<8x4xf32, #tpu.memory_space<vmem>>, vector<8x1xf32>
    tpu.vector_store %arg14[%c0_45, %c2_46], %80 {strides = array<i32>} : memref<8x4xf32, #tpu.memory_space<vmem>>, vector<8x1xf32>,
    %cst_47 = arith.constant dense<0.000000e+00> : vector<8x8xf32>
    %82 = tpu.matmul %75, %65, %cst_47 {dimension_numbers = #tpu.dot_dimension_numbers<[1], [0], [0], [1], [0, 0, 1, 1], [], []>} : vector<8x8xf32>, vector<8x8xf32>, vector<8x8xf32> -> vector<8x8xf32>
    %c0_48 = arith.constant 0 : index
    %c16 = arith.constant 16 : index
    %83 = vector.load %arg15[%c0_48, %c16] : memref<8x32xf32, #tpu.memory_space<vmem>>, vector<8x8xf32>
    %84 = vector.broadcast %72 : vector<8x1xf32> to vector<8x8xf32>
    %85 = arith.mulf %84, %83 : vector<8x8xf32>
    %86 = arith.addf %85, %82 : vector<8x8xf32>
    %c0_49 = arith.constant 0 : index
    %c16_50 = arith.constant 16 : index
    %87 = vector.load %arg15[%c0_49, %c16_50] : memref<8x32xf32, #tpu.memory_space<vmem>>, vector<8x8xf32>
    tpu.vector_store %arg15[%c0_49, %c16_50], %86 {strides = array<i32>} : memref<8x32xf32, #tpu.memory_space<vmem>>, vector<8x8xf32>,
    %c0_51 = arith.constant 0 : index
    %c2_52 = arith.constant 2 : index
    %88 = vector.load %arg13[%c0_51, %c2_52] : memref<8x4xf32, #tpu.memory_space<vmem>>, vector<8x1xf32>
    tpu.vector_store %arg13[%c0_51, %c2_52], %70 {strides = array<i32>} : memref<8x4xf32, #tpu.memory_space<vmem>>, vector<8x1xf32>,
    %89 = vector.extract_strided_slice %10 {offsets = [0, 24], sizes = [8, 8], strides = [1, 1]} : vector<8x32xf32> to vector<8x8xf32>
    %90 = vector.extract_strided_slice %9 {offsets = [0, 24], sizes = [8, 8], strides = [1, 1]} : vector<8x64xf32> to vector<8x8xf32>
    %91 = vector.extract_strided_slice %9 {offsets = [0, 56], sizes = [8, 8], strides = [1, 1]} : vector<8x64xf32> to vector<8x8xf32>
    %cst_53 = arith.constant dense<0.000000e+00> : vector<8x8xf32>
    %92 = tpu.matmul %89, %90, %cst_53 {dimension_numbers = #tpu.dot_dimension_numbers<[1], [1], [0], [0], [0, 0, 1, 0], [], []>} : vector<8x8xf32>, vector<8x8xf32>, vector<8x8xf32> -> vector<8x8xf32>
    %c0_54 = arith.constant 0 : index
    %c3 = arith.constant 3 : index
    %93 = vector.load %arg13[%c0_54, %c3] : memref<8x4xf32, #tpu.memory_space<vmem>>, vector<8x1xf32>
    %cst_55 = arith.constant dense<0xFF800000> : vector<8xf32>
    %94 = vector.multi_reduction <maximumf>, %92, %cst_55 [1] : vector<8x8xf32> to vector<8xf32>
    %95 = vector.shape_cast %94 : vector<8xf32> to vector<8x1xf32>
    %96 = arith.maximumf %93, %95 : vector<8x1xf32>
    %97 = arith.subf %93, %96 : vector<8x1xf32>
    %98 = math.exp %97 : vector<8x1xf32>
    %99 = vector.broadcast %96 : vector<8x1xf32> to vector<8x8xf32>
    %100 = arith.subf %92, %99 : vector<8x8xf32>
    %101 = math.exp %100 : vector<8x8xf32>
    %c0_56 = arith.constant 0 : index
    %c3_57 = arith.constant 3 : index
    %102 = vector.load %arg14[%c0_56, %c3_57] : memref<8x4xf32, #tpu.memory_space<vmem>>, vector<8x1xf32>
    %103 = arith.mulf %98, %102 : vector<8x1xf32>
    %cst_58 = arith.constant dense<0.000000e+00> : vector<8xf32>
    %104 = vector.multi_reduction <add>, %101, %cst_58 [1] : vector<8x8xf32> to vector<8xf32>
    %105 = vector.shape_cast %104 : vector<8xf32> to vector<8x1xf32>
    %106 = arith.addf %103, %105 : vector<8x1xf32>
    %c0_59 = arith.constant 0 : index
    %c3_60 = arith.constant 3 : index
    %107 = vector.load %arg14[%c0_59, %c3_60] : memref<8x4xf32, #tpu.memory_space<vmem>>, vector<8x1xf32>
    tpu.vector_store %arg14[%c0_59, %c3_60], %106 {strides = array<i32>} : memref<8x4xf32, #tpu.memory_space<vmem>>, vector<8x1xf32>,
    %cst_61 = arith.constant dense<0.000000e+00> : vector<8x8xf32>
    %108 = tpu.matmul %101, %91, %cst_61 {dimension_numbers = #tpu.dot_dimension_numbers<[1], [0], [0], [1], [0, 0, 1, 1], [], []>} : vector<8x8xf32>, vector<8x8xf32>, vector<8x8xf32> -> vector<8x8xf32>
    %c0_62 = arith.constant 0 : index
    %c24 = arith.constant 24 : index
    %109 = vector.load %arg15[%c0_62, %c24] : memref<8x32xf32, #tpu.memory_space<vmem>>, vector<8x8xf32>
    %110 = vector.broadcast %98 : vector<8x1xf32> to vector<8x8xf32>
    %111 = arith.mulf %110, %109 : vector<8x8xf32>
    %112 = arith.addf %111, %108 : vector<8x8xf32>
    %c0_63 = arith.constant 0 : index
    %c24_64 = arith.constant 24 : index
    %113 = vector.load %arg15[%c0_63, %c24_64] : memref<8x32xf32, #tpu.memory_space<vmem>>, vector<8x8xf32>
    tpu.vector_store %arg15[%c0_63, %c24_64], %112 {strides = array<i32>} : memref<8x32xf32, #tpu.memory_space<vmem>>, vector<8x8xf32>,
    %c0_65 = arith.constant 0 : index
    %c3_66 = arith.constant 3 : index
    %114 = vector.load %arg13[%c0_65, %c3_66] : memref<8x4xf32, #tpu.memory_space<vmem>>, vector<8x1xf32>
    tpu.vector_store %arg13[%c0_65, %c3_66], %96 {strides = array<i32>} : memref<8x4xf32, #tpu.memory_space<vmem>>, vector<8x1xf32>,
    %c0_i32_67 = arith.constant 0 : i32
    %115 = arith.cmpi eq, %arg2, %c0_i32_67 : i32
    %116 = arith.extui %115 : i1 to i32
    %c0_i32_68 = arith.constant 0 : i32
    %117 = arith.cmpi ne, %116, %c0_i32_68 : i32
    scf.if %117 {
      %c0_69 = arith.constant 0 : index
      %c0_70 = arith.constant 0 : index
      %118 = vector.load %arg14[%c0_69, %c0_70] : memref<8x4xf32, #tpu.memory_space<vmem>>, vector<8x4xf32>
      %119 = tpu.reciprocal %118 : vector<8x4xf32> -> vector<8x4xf32>
      %c0_71 = arith.constant 0 : index
      %c0_72 = arith.constant 0 : index
      %120 = vector.load %arg15[%c0_71, %c0_72] : memref<8x32xf32, #tpu.memory_space<vmem>>, vector<8x8xf32>
      %121 = vector.extract_strided_slice %119 {offsets = [0, 0], sizes = [8, 1], strides = [1, 1]} : vector<8x4xf32> to vector<8x1xf32>
      %122 = vector.broadcast %121 : vector<8x1xf32> to vector<8x8xf32>
      %123 = arith.mulf %120, %122 : vector<8x8xf32>
      %c0_73 = arith.constant 0 : index
      %c0_74 = arith.constant 0 : index
      %124 = vector.load %arg15[%c0_73, %c0_74] : memref<8x32xf32, #tpu.memory_space<vmem>>, vector<8x8xf32>
      tpu.vector_store %arg15[%c0_73, %c0_74], %123 {strides = array<i32>} : memref<8x32xf32, #tpu.memory_space<vmem>>, vector<8x8xf32>,
      %c0_75 = arith.constant 0 : index
      %c8_76 = arith.constant 8 : index
      %125 = vector.load %arg15[%c0_75, %c8_76] : memref<8x32xf32, #tpu.memory_space<vmem>>, vector<8x8xf32>
      %126 = vector.extract_strided_slice %119 {offsets = [0, 1], sizes = [8, 1], strides = [1, 1]} : vector<8x4xf32> to vector<8x1xf32>
      %127 = vector.broadcast %126 : vector<8x1xf32> to vector<8x8xf32>
      %128 = arith.mulf %125, %127 : vector<8x8xf32>
      %c0_77 = arith.constant 0 : index
      %c8_78 = arith.constant 8 : index
      %129 = vector.load %arg15[%c0_77, %c8_78] : memref<8x32xf32, #tpu.memory_space<vmem>>, vector<8x8xf32>
      tpu.vector_store %arg15[%c0_77, %c8_78], %128 {strides = array<i32>} : memref<8x32xf32, #tpu.memory_space<vmem>>, vector<8x8xf32>,
      %c0_79 = arith.constant 0 : index
      %c16_80 = arith.constant 16 : index
      %130 = vector.load %arg15[%c0_79, %c16_80] : memref<8x32xf32, #tpu.memory_space<vmem>>, vector<8x8xf32>
      %131 = vector.extract_strided_slice %119 {offsets = [0, 2], sizes = [8, 1], strides = [1, 1]} : vector<8x4xf32> to vector<8x1xf32>
      %132 = vector.broadcast %131 : vector<8x1xf32> to vector<8x8xf32>
      %133 = arith.mulf %130, %132 : vector<8x8xf32>
      %c0_81 = arith.constant 0 : index
      %c16_82 = arith.constant 16 : index
      %134 = vector.load %arg15[%c0_81, %c16_82] : memref<8x32xf32, #tpu.memory_space<vmem>>, vector<8x8xf32>
      tpu.vector_store %arg15[%c0_81, %c16_82], %133 {strides = array<i32>} : memref<8x32xf32, #tpu.memory_space<vmem>>, vector<8x8xf32>,
      %c0_83 = arith.constant 0 : index
      %c24_84 = arith.constant 24 : index
      %135 = vector.load %arg15[%c0_83, %c24_84] : memref<8x32xf32, #tpu.memory_space<vmem>>, vector<8x8xf32>
      %136 = vector.extract_strided_slice %119 {offsets = [0, 3], sizes = [8, 1], strides = [1, 1]} : vector<8x4xf32> to vector<8x1xf32>
      %137 = vector.broadcast %136 : vector<8x1xf32> to vector<8x8xf32>
      %138 = arith.mulf %135, %137 : vector<8x8xf32>
      %c0_85 = arith.constant 0 : index
      %c24_86 = arith.constant 24 : index
      %139 = vector.load %arg15[%c0_85, %c24_86] : memref<8x32xf32, #tpu.memory_space<vmem>>, vector<8x8xf32>
      tpu.vector_store %arg15[%c0_85, %c24_86], %138 {strides = array<i32>} : memref<8x32xf32, #tpu.memory_space<vmem>>, vector<8x8xf32>,
      %c0_87 = arith.constant 0 : index
      %c0_88 = arith.constant 0 : index
      %140 = vector.load %arg15[%c0_87, %c0_88] : memref<8x32xf32, #tpu.memory_space<vmem>>, vector<8x32xf32>
      %c0_89 = arith.constant 0 : index
      %c0_90 = arith.constant 0 : index
      %c0_91 = arith.constant 0 : index
      %141 = vector.load %arg3[%c0_89, %c0_90, %c0_91] : memref<1x8x32xf32, #tpu.memory_space<vmem>>, vector<1x8x32xf32>
      %142 = vector.shape_cast %141 : vector<1x8x32xf32> to vector<8x32xf32>
      %143 = arith.addf %140, %142 : vector<8x32xf32>
      %cst_92 = arith.constant dense<0.000000e+00> : vector<8xf32>
      %144 = vector.multi_reduction <add>, %143, %cst_92 [1] : vector<8x32xf32> to vector<8xf32>
      %145 = vector.shape_cast %144 : vector<8xf32> to vector<8x1xf32>
      %cst_93 = arith.constant 3.200000e+01 : f32
      %146 = vector.broadcast %cst_93 : f32 to vector<8x1xf32>
      %147 = arith.divf %145, %146 : vector<8x1xf32>
      %148 = vector.broadcast %147 : vector<8x1xf32> to vector<8x32xf32>
      %149 = arith.subf %143, %148 : vector<8x32xf32>
      %150 = arith.mulf %149, %149 : vector<8x32xf32>
      %cst_94 = arith.constant dense<0.000000e+00> : vector<8xf32>
      %151 = vector.multi_reduction <add>, %150, %cst_94 [1] : vector<8x32xf32> to vector<8xf32>
      %152 = vector.shape_cast %151 : vector<8xf32> to vector<8x1xf32>
      %cst_95 = arith.constant 3.200000e+01 : f32
      %153 = vector.broadcast %cst_95 : f32 to vector<8x1xf32>
      %154 = arith.divf %152, %153 : vector<8x1xf32>
      %cst_96 = arith.constant 9.99999974E-6 : f32
      %155 = vector.broadcast %cst_96 : f32 to vector<8x1xf32>
      %156 = arith.addf %154, %155 : vector<8x1xf32>
      %157 = math.rsqrt %156 : vector<8x1xf32>
      %158 = vector.broadcast %157 : vector<8x1xf32> to vector<8x32xf32>
      %159 = arith.mulf %149, %158 : vector<8x32xf32>
      %c0_97 = arith.constant 0 : index
      %c0_98 = arith.constant 0 : index
      %160 = vector.load %arg9[%c0_97, %c0_98] : memref<1x32xf32, #tpu.memory_space<vmem>>, vector<1x32xf32>
      %161 = vector.broadcast %160 : vector<1x32xf32> to vector<8x32xf32>
      %162 = arith.mulf %159, %161 : vector<8x32xf32>
      %c0_99 = arith.constant 0 : index
      %c0_100 = arith.constant 0 : index
      %163 = vector.load %arg10[%c0_99, %c0_100] : memref<1x32xf32, #tpu.memory_space<vmem>>, vector<1x32xf32>
      %164 = vector.broadcast %163 : vector<1x32xf32> to vector<8x32xf32>
      %165 = arith.addf %162, %164 : vector<8x32xf32>
      %c0_101 = arith.constant 0 : index
      %c0_102 = arith.constant 0 : index
      %c0_103 = arith.constant 0 : index
      %166 = vector.load %arg11[%c0_101, %c0_102, %c0_103] : memref<1x8x32xf32, #tpu.memory_space<vmem>>, vector<1x8x32xf32>
      %167 = vector.shape_cast %166 : vector<1x8x32xf32> to vector<8x32xf32>
      %168 = vector.shape_cast %165 : vector<8x32xf32> to vector<1x8x32xf32>
      tpu.vector_store %arg11[%c0_101, %c0_102, %c0_103], %168 {strides = array<i32>} : memref<1x8x32xf32, #tpu.memory_space<vmem>>, vector<1x8x32xf32>,
    } else {
    }
    return
  }
  func.func @transform_0(%arg0: i32, %arg1: i32, %arg2: i32) -> (i32, i32, i32) {
    %c0_i32 = arith.constant 0 : i32
    %c0_i32_0 = arith.constant 0 : i32
    return %arg0, %arg1, %c0_i32 : i32, i32, i32
  }
  func.func @transform_1(%arg0: i32, %arg1: i32, %arg2: i32) -> (i32, i32, i32) {
    %c0_i32 = arith.constant 0 : i32
    %c0_i32_0 = arith.constant 0 : i32
    return %arg0, %arg2, %c0_i32 : i32, i32, i32
  }
  func.func @transform_2(%arg0: i32, %arg1: i32, %arg2: i32) -> (i32, i32) {
    %c0_i32 = arith.constant 0 : i32
    %c0_i32_0 = arith.constant 0 : i32
    %c0_i32_1 = arith.constant 0 : i32
    return %c0_i32, %c0_i32_0 : i32, i32
  }
  func.func @transform_3(%arg0: i32, %arg1: i32, %arg2: i32) -> (i32, i32) {
    %c0_i32 = arith.constant 0 : i32
    %c0_i32_0 = arith.constant 0 : i32
    %c0_i32_1 = arith.constant 0 : i32
    return %c0_i32, %c0_i32_0 : i32, i32
  }
  func.func @transform_4(%arg0: i32, %arg1: i32, %arg2: i32) -> (i32, i32) {
    %c0_i32 = arith.constant 0 : i32
    %c0_i32_0 = arith.constant 0 : i32
    %c0_i32_1 = arith.constant 0 : i32
    return %c0_i32, %c0_i32_0 : i32, i32
  }
  func.func @transform_5(%arg0: i32, %arg1: i32, %arg2: i32) -> (i32, i32) {
    %c0_i32 = arith.constant 0 : i32
    %c0_i32_0 = arith.constant 0 : i32
    %c0_i32_1 = arith.constant 0 : i32
    return %c0_i32, %c0_i32_0 : i32, i32
  }
  func.func @transform_6(%arg0: i32, %arg1: i32, %arg2: i32) -> (i32, i32) {
    %c0_i32 = arith.constant 0 : i32
    %c0_i32_0 = arith.constant 0 : i32
    %c0_i32_1 = arith.constant 0 : i32
    return %c0_i32, %c0_i32_0 : i32, i32
  }
  func.func @transform_7(%arg0: i32, %arg1: i32, %arg2: i32) -> (i32, i32) {
    %c0_i32 = arith.constant 0 : i32
    %c0_i32_0 = arith.constant 0 : i32
    %c0_i32_1 = arith.constant 0 : i32
    return %c0_i32, %c0_i32_0 : i32, i32
  }
  func.func @transform_8(%arg0: i32, %arg1: i32, %arg2: i32) -> (i32, i32, i32) {
    %c0_i32 = arith.constant 0 : i32
    %c0_i32_0 = arith.constant 0 : i32
    return %arg0, %arg1, %c0_i32 : i32, i32, i32
  }
}

</mosaic_0001>

<llo_original>
// kernel: tpu_custom_call.1
$region0: #{tpu_custom_call.1}
  #allocation0 [shape = 'u32[]', space=smem, size = 0x4, offset = 0x4, fixed_abs, tag = 'smem constant byte address 0x4 - core index']
  #allocation1 [shape = 'u32[144,128]{1,0:T(1,128)}', space=vmem, size = 0x12000, scoped, tag = 'internal scratch']
  #allocation2 [shape = 'f32[8,32]{1,0:T(8,128)}', space=vmem, size = 0x1000, scoped, tag = 'scratch operand']
  #allocation3 [shape = 'f32[8,4]{1,0:T(8,128)}', space=vmem, size = 0x1000, scoped, tag = 'scratch operand']
  #allocation4 [shape = 'f32[8,4]{1,0:T(8,128)}', space=vmem, size = 0x1000, scoped, tag = 'scratch operand']
  #allocation5 [shape = 'f32[8,32]{1,0:T(8,128)}', space=vmem, size = 0x1000, scoped, tag = 'scratch operand']
  %s0 = inlined_call_operand.hbm [shape: f32[2,8,32], index: 0, kind: input, shape index: {}]
  %s1 = inlined_call_operand.hbm [shape: f32[2,8,32], index: 1, kind: input, shape index: {}]
  %s2 = inlined_call_operand.hbm [shape: f32[32,32], index: 2, kind: input, shape index: {}]
  %s3 = inlined_call_operand.vmem [shape: f32[1,32], index: 3, kind: input, shape index: {}]
  %s4 = inlined_call_operand.hbm [shape: f32[32,64], index: 4, kind: input, shape index: {}]
  %s5 = inlined_call_operand.vmem [shape: f32[1,64], index: 5, kind: input, shape index: {}]
  %s6 = inlined_call_operand.vmem [shape: f32[1,32], index: 6, kind: input, shape index: {}]
  %s7 = inlined_call_operand.vmem [shape: f32[1,32], index: 7, kind: input, shape index: {}]
  %s8 = inlined_call_operand.hbm [shape: f32[2,8,32], index: 8, kind: output, shape index: {}]
  %s9 = sld [smem:[#allocation0]]
  $region89: #{tpu_custom_call.1} parent=0
    _
  %s11 = ssub.s32 1, %s9
  %s12 = scalar_select 0, %s11, %s9
  $region1: #{tpu_custom_call.1} parent=0
    #allocation6 [shape = 'u8[8192]{0}', space=vmem, size = 0x2000, scoped, tag = 'input window, operand 0']
    #allocation7 [shape = 's32[2]{0}', space=sflag, size = 0x8, scoped, tag = 'scoped memory for tpu_custom_call.1']
    #allocation8 [shape = 's32[2]{0}', space=sflag, size = 0x8, scoped, tag = 'scoped memory for tpu_custom_call.1']
    #allocation9 [shape = 'u8[8192]{0}', space=vmem, size = 0x2000, scoped, tag = 'input window, operand 1']
    #allocation10 [shape = 's32[2]{0}', space=sflag, size = 0x8, scoped, tag = 'scoped memory for tpu_custom_call.1']
    #allocation11 [shape = 'u8[16384]{0}', space=vmem, size = 0x4000, scoped, tag = 'input window, operand 2, single buffered']
    #allocation12 [shape = 'u8[16384]{0}', space=vmem, size = 0x4000, scoped, tag = 'input window, operand 4, single buffered']
    #allocation13 [shape = 's32[1]{0}', space=sflag, size = 0x4, scoped, tag = 'scoped memory for tpu_custom_call.1']
    #allocation14 [shape = 'u8[8192]{0}', space=vmem, size = 0x2000, scoped, tag = 'output window, operand 0']
    %13 = vsyncpa [#allocation7], 0
    %s14 = scalar_lea.sflag [#allocation7], 1
    %15 = vsyncpa %s14, 0
    %16 = vsyncpa [#allocation10], 0
    %s17 = scalar_lea.sflag [#allocation10], 1
    %18 = vsyncpa %s17, 0
    %19 = vsyncpa [#allocation13], 0
    %20 = vsyncpa [#allocation8], 0
    %s21 = scalar_lea.sflag [#allocation8], 1
    %22 = vsyncpa %s21, 0
    loop: start=0, step=1, limit=4
    $region2: #{tpu_custom_call.1} parent=1 // loop_pre_header
      _
    $region3: #{tpu_custom_call.1} parent=1 // loop_header
      %s24 = sphi 0, %s28
      %p25 = scmp.ge.s32.totalorder %s24, 4
      %s31 = sphi 0, %s50
      %s32 = sphi 0, %s46
      %s33 = sphi 0, %s42
      %s34 = sphi 0, %s31
      %s35 = sphi 0, %s32
      %s36 = sphi 0, %s33
      %s37 = sphi 0, %s34
      %s38 = sphi 0, %s35
      %s39 = sphi 0, %s36
      %s55 = sphi 0, %s57
      %s58 = sphi 0, %s55
      %s59 = sphi 0, %s58
      %s75 = sphi 0, %s59
      %s83 = sphi 0, %s85
      %s86 = sphi 0, %s83
      %s87 = sphi 0, %s86
      %s103 = sphi 0, %s87
      %s107 = sphi 0, %s107
      %s109 = sphi 0, %s107
      %s110 = sphi 0, %s109
      %s124 = sphi 0, %s110
      %s128 = sphi 0, %s128
      %s130 = sphi 0, %s128
      %s131 = sphi 0, %s130
      %s145 = sphi 0, %s131
      %s149 = sphi 0, %s149
      %s151 = sphi 0, %s149
      %s152 = sphi 0, %s151
      %s166 = sphi 0, %s152
      %s170 = sphi 0, %s170
      %s172 = sphi 0, %s170
      %s173 = sphi 0, %s172
      %s187 = sphi 0, %s173
      %s191 = sphi 0, %s191
      %s193 = sphi 0, %s191
      %s194 = sphi 0, %s193
      %s208 = sphi 0, %s194
      %s212 = sphi 0, %s212
      %s214 = sphi 0, %s212
      %s215 = sphi 0, %s214
      %s229 = sphi 0, %s215
      %s237 = sphi 0, %s239
      %s240 = sphi 0, %s237
      %s241 = sphi 0, %s240
      %s257 = sphi 0, %s241
    $region4: #{tpu_custom_call.1} parent=1 // loop_header_branch
      %27 = sbr.rel (%p25) target = $region8
    $region5: #{tpu_custom_call.1} parent=1 // loop_body
      %s29 = ssub.s32 %s24, 1
      %s30 = ssub.s32 %s24, 2
      %s40 = sadd.s32 1, %s33
      %p41 = scmp.ge.s32.totalorder %s40, 1
      %s42 = scalar_select %p41, 0, %s40
      %s43 = sadd.s32 1, %s32
      %s44 = scalar_select %p41, %s43, %s32
      %p45 = scmp.ge.s32.totalorder %s44, 1
      %s46 = scalar_select %p45, 0, %s44
      %s47 = sadd.s32 1, %s31
      %s48 = scalar_select %p45, %s47, %s31
      %p49 = scmp.ge.s32.totalorder %s48, 2
      %s50 = scalar_select %p49, 0, %s48
      %s51 = ssub.s32 %s31, %s50
      %s52 = ssub.s32 %s32, %s46
      %s53 = sor.u32 %s51, %s52
      %p54 = scmp.eq.s32.totalorder %s53, 0
      %s56 = sadd.s32 %s55, 1
      %s57 = scalar_select %p54, %s55, %s56
      %p60 = pneg %p54
      %p61 = scmp.eq.s32.totalorder %s24, 1
      %p62 = por %p60, %p61
      %p63 = scmp.ne.s32.totalorder %s55, %s58
      %p64 = scmp.eq.s32.totalorder %s24, 0
      %p65 = por %p63, %p64
      %p66 = scmp.ne.s32.totalorder %s55, %s58
      %p67 = scmp.eq.s32.totalorder %s29, 1
      %p68 = por %p66, %p67
      %p69 = scmp.ne.s32.totalorder %s58, %s59
      %p70 = scmp.eq.s32.totalorder %s29, 0
      %p71 = por %p69, %p70
      %p72 = scmp.ne.s32.totalorder %s58, %s59
      %p73 = scmp.eq.s32.totalorder %s30, 1
      %p74 = por %p72, %p73
      %p76 = scmp.ne.s32.totalorder %s59, %s75
      %p77 = scmp.eq.s32.totalorder %s30, 0
      %p78 = por %p76, %p77
      %s79 = ssub.s32 %s31, %s50
      %s80 = ssub.s32 %s33, %s42
      %s81 = sor.u32 %s79, %s80
      %p82 = scmp.eq.s32.totalorder %s81, 0
      %s84 = sadd.s32 %s83, 1
      %s85 = scalar_select %p82, %s83, %s84
      %p88 = pneg %p82
      %p89 = scmp.eq.s32.totalorder %s24, 1
      %p90 = por %p88, %p89
      %p91 = scmp.ne.s32.totalorder %s83, %s86
      %p92 = scmp.eq.s32.totalorder %s24, 0
      %p93 = por %p91, %p92
      %p94 = scmp.ne.s32.totalorder %s83, %s86
      %p95 = scmp.eq.s32.totalorder %s29, 1
      %p96 = por %p94, %p95
      %p97 = scmp.ne.s32.totalorder %s86, %s87
      %p98 = scmp.eq.s32.totalorder %s29, 0
      %p99 = por %p97, %p98
      %p100 = scmp.ne.s32.totalorder %s86, %s87
      %p101 = scmp.eq.s32.totalorder %s30, 1
      %p102 = por %p100, %p101
      %p104 = scmp.ne.s32.totalorder %s87, %s103
      %p105 = scmp.eq.s32.totalorder %s30, 0
      %p106 = por %p104, %p105
      %s108 = sadd.s32 %s107, 1
      %p111 = scmp.eq.s32.totalorder %s24, 1
      %p112 = scmp.ne.s32.totalorder %s107, %s109
      %p113 = scmp.eq.s32.totalorder %s24, 0
      %p114 = por %p112, %p113
      %p115 = scmp.ne.s32.totalorder %s107, %s109
      %p116 = scmp.eq.s32.totalorder %s29, 1
      %p117 = por %p115, %p116
      %p118 = scmp.ne.s32.totalorder %s109, %s110
      %p119 = scmp.eq.s32.totalorder %s29, 0
      %p120 = por %p118, %p119
      %p121 = scmp.ne.s32.totalorder %s109, %s110
      %p122 = scmp.eq.s32.totalorder %s30, 1
      %p123 = por %p121, %p122
      %p125 = scmp.ne.s32.totalorder %s110, %s124
      %p126 = scmp.eq.s32.totalorder %s30, 0
      %p127 = por %p125, %p126
      %s129 = sadd.s32 %s128, 1
      %p132 = scmp.eq.s32.totalorder %s24, 1
      %p133 = scmp.ne.s32.totalorder %s128, %s130
      %p134 = scmp.eq.s32.totalorder %s24, 0
      %p135 = por %p133, %p134
      %p136 = scmp.ne.s32.totalorder %s128, %s130
      %p137 = scmp.eq.s32.totalorder %s29, 1
      %p138 = por %p136, %p137
      %p139 = scmp.ne.s32.totalorder %s130, %s131
      %p140 = scmp.eq.s32.totalorder %s29, 0
      %p141 = por %p139, %p140
      %p142 = scmp.ne.s32.totalorder %s130, %s131
      %p143 = scmp.eq.s32.totalorder %s30, 1
      %p144 = por %p142, %p143
      %p146 = scmp.ne.s32.totalorder %s131, %s145
      %p147 = scmp.eq.s32.totalorder %s30, 0
      %p148 = por %p146, %p147
      %s150 = sadd.s32 %s149, 1
      %p153 = scmp.eq.s32.totalorder %s24, 1
      %p154 = scmp.ne.s32.totalorder %s149, %s151
      %p155 = scmp.eq.s32.totalorder %s24, 0
      %p156 = por %p154, %p155
      %p157 = scmp.ne.s32.totalorder %s149, %s151
      %p158 = scmp.eq.s32.totalorder %s29, 1
      %p159 = por %p157, %p158
      %p160 = scmp.ne.s32.totalorder %s151, %s152
      %p161 = scmp.eq.s32.totalorder %s29, 0
      %p162 = por %p160, %p161
      %p163 = scmp.ne.s32.totalorder %s151, %s152
      %p164 = scmp.eq.s32.totalorder %s30, 1
      %p165 = por %p163, %p164
      %p167 = scmp.ne.s32.totalorder %s152, %s166
      %p168 = scmp.eq.s32.totalorder %s30, 0
      %p169 = por %p167, %p168
      %s171 = sadd.s32 %s170, 1
      %p174 = scmp.eq.s32.totalorder %s24, 1
      %p175 = scmp.ne.s32.totalorder %s170, %s172
      %p176 = scmp.eq.s32.totalorder %s24, 0
      %p177 = por %p175, %p176
      %p178 = scmp.ne.s32.totalorder %s170, %s172
      %p179 = scmp.eq.s32.totalorder %s29, 1
      %p180 = por %p178, %p179
      %p181 = scmp.ne.s32.totalorder %s172, %s173
      %p182 = scmp.eq.s32.totalorder %s29, 0
      %p183 = por %p181, %p182
      %p184 = scmp.ne.s32.totalorder %s172, %s173
      %p185 = scmp.eq.s32.totalorder %s30, 1
      %p186 = por %p184, %p185
      %p188 = scmp.ne.s32.totalorder %s173, %s187
      %p189 = scmp.eq.s32.totalorder %s30, 0
      %p190 = por %p188, %p189
      %s192 = sadd.s32 %s191, 1
      %p195 = scmp.eq.s32.totalorder %s24, 1
      %p196 = scmp.ne.s32.totalorder %s191, %s193
      %p197 = scmp.eq.s32.totalorder %s24, 0
      %p198 = por %p196, %p197
      %p199 = scmp.ne.s32.totalorder %s191, %s193
      %p200 = scmp.eq.s32.totalorder %s29, 1
      %p201 = por %p199, %p200
      %p202 = scmp.ne.s32.totalorder %s193, %s194
      %p203 = scmp.eq.s32.totalorder %s29, 0
      %p204 = por %p202, %p203
      %p205 = scmp.ne.s32.totalorder %s193, %s194
      %p206 = scmp.eq.s32.totalorder %s30, 1
      %p207 = por %p205, %p206
      %p209 = scmp.ne.s32.totalorder %s194, %s208
      %p210 = scmp.eq.s32.totalorder %s30, 0
      %p211 = por %p209, %p210
      %s213 = sadd.s32 %s212, 1
      %p216 = scmp.eq.s32.totalorder %s24, 1
      %p217 = scmp.ne.s32.totalorder %s212, %s214
      %p218 = scmp.eq.s32.totalorder %s24, 0
      %p219 = por %p217, %p218
      %p220 = scmp.ne.s32.totalorder %s212, %s214
      %p221 = scmp.eq.s32.totalorder %s29, 1
      %p222 = por %p220, %p221
      %p223 = scmp.ne.s32.totalorder %s214, %s215
      %p224 = scmp.eq.s32.totalorder %s29, 0
      %p225 = por %p223, %p224
      %p226 = scmp.ne.s32.totalorder %s214, %s215
      %p227 = scmp.eq.s32.totalorder %s30, 1
      %p228 = por %p226, %p227
      %p230 = scmp.ne.s32.totalorder %s215, %s229
      %p231 = scmp.eq.s32.totalorder %s30, 0
      %p232 = por %p230, %p231
      %s233 = ssub.s32 %s31, %s50
      %s234 = ssub.s32 %s32, %s46
      %s235 = sor.u32 %s233, %s234
      %p236 = scmp.eq.s32.totalorder %s235, 0
      %s238 = sadd.s32 %s237, 1
      %s239 = scalar_select %p236, %s237, %s238
      %p242 = pneg %p236
      %p243 = scmp.eq.s32.totalorder %s24, 1
      %p244 = por %p242, %p243
      %p245 = scmp.ne.s32.totalorder %s237, %s240
      %p246 = scmp.eq.s32.totalorder %s24, 0
      %p247 = por %p245, %p246
      %p248 = scmp.ne.s32.totalorder %s237, %s240
      %p249 = scmp.eq.s32.totalorder %s29, 1
      %p250 = por %p248, %p249
      %p251 = scmp.ne.s32.totalorder %s240, %s241
      %p252 = scmp.eq.s32.totalorder %s29, 0
      %p253 = por %p251, %p252
      %p254 = scmp.ne.s32.totalorder %s240, %s241
      %p255 = scmp.eq.s32.totalorder %s30, 1
      %p256 = por %p254, %p255
      %p258 = scmp.ne.s32.totalorder %s241, %s257
      %p259 = scmp.eq.s32.totalorder %s30, 0
      %p260 = por %p258, %p259
      %p261 = scmp.le.s32.totalorder 1, %s24
      %p262 = scmp.lt.s32.totalorder %s24, 3
      %p263 = pnand %p261, %p262
      %p264 = pneg %p263
      // Predicated region
      $region9: #{tpu_custom_call.1} parent=5 // pred_check
        _
      $region10: #{tpu_custom_call.1} parent=5 // pred_check_branch
        %266 = sbr.rel (%p263) target = $region12
      $region11: #{tpu_custom_call.1} parent=5 // pred_region
        %s267 = ssub.s32 %s24, 1
        // Predicated region
        $region13: #{tpu_custom_call.1} parent=11 // pred_check
          %p268 = pneg %p120
        $region14: #{tpu_custom_call.1} parent=11 // pred_check_branch
          %270 = sbr.rel (%p268) target = $region16
        $region15: #{tpu_custom_call.1} parent=11 // pred_region
          %s272 = ssub.s32 512, 512
          %273 = vsyncadd [#allocation10], %s272
          %s274 = sshll.u32 [#allocation11], 4
          %s275 = int_to_ptr.vmem [resolvable:$true] %s274
          %280 = dma.hbm_to_vmem [thread:$0]  %s2, 512, %s275, [#allocation10], 128, 128, 8
        $region16: #{tpu_custom_call.1} parent=11 // pred_fallthru
          _
        // Predicated region
        $region17: #{tpu_custom_call.1} parent=11 // pred_check
          %p281 = pneg %p141
        $region18: #{tpu_custom_call.1} parent=11 // pred_check_branch
          %283 = sbr.rel (%p281) target = $region20
        $region19: #{tpu_custom_call.1} parent=11 // pred_region
          _
        $region20: #{tpu_custom_call.1} parent=11 // pred_fallthru
          _
        // Predicated region
        $region21: #{tpu_custom_call.1} parent=11 // pred_check
          %p284 = pneg %p162
        $region22: #{tpu_custom_call.1} parent=11 // pred_check_branch
          %286 = sbr.rel (%p284) target = $region24
        $region23: #{tpu_custom_call.1} parent=11 // pred_region
          %s288 = ssub.s32 512, 512
          %289 = vsyncadd [#allocation13], %s288
          %s290 = sshll.u32 [#allocation12], 4
          %s291 = int_to_ptr.vmem [resolvable:$true] %s290
          %296 = dma.hbm_to_vmem [thread:$0]  %s4, 512, %s291, [#allocation13], 128, 128, 8
        $region24: #{tpu_custom_call.1} parent=11 // pred_fallthru
          _
        // Predicated region
        $region25: #{tpu_custom_call.1} parent=11 // pred_check
          %p297 = pneg %p183
        $region26: #{tpu_custom_call.1} parent=11 // pred_check_branch
          %299 = sbr.rel (%p297) target = $region28
        $region27: #{tpu_custom_call.1} parent=11 // pred_region
          _
        $region28: #{tpu_custom_call.1} parent=11 // pred_fallthru
          _
        // Predicated region
        $region29: #{tpu_custom_call.1} parent=11 // pred_check
          %p300 = pneg %p204
        $region30: #{tpu_custom_call.1} parent=11 // pred_check_branch
          %302 = sbr.rel (%p300) target = $region32
        $region31: #{tpu_custom_call.1} parent=11 // pred_region
          _
        $region32: #{tpu_custom_call.1} parent=11 // pred_fallthru
          _
        // Predicated region
        $region33: #{tpu_custom_call.1} parent=11 // pred_check
          %p303 = pneg %p225
        $region34: #{tpu_custom_call.1} parent=11 // pred_check_branch
          %305 = sbr.rel (%p303) target = $region36
        $region35: #{tpu_custom_call.1} parent=11 // pred_region
          _
        $region36: #{tpu_custom_call.1} parent=11 // pred_fallthru
          _
      $region12: #{tpu_custom_call.1} parent=5 // pred_fallthru
        _
      %p306 = scmp.lt.s32.totalorder %s24, 2
      // Predicated region
      $region37: #{tpu_custom_call.1} parent=5 // pred_check
        %p307 = pneg %p306
      $region38: #{tpu_custom_call.1} parent=5 // pred_check_branch
        %309 = sbr.rel (%p307) target = $region40
      $region39: #{tpu_custom_call.1} parent=5 // pred_region
        // Predicated region
        $region41: #{tpu_custom_call.1} parent=39 // pred_check
          %p310 = pneg %p65
        $region42: #{tpu_custom_call.1} parent=39 // pred_check_branch
          %312 = sbr.rel (%p310) target = $region44
        $region43: #{tpu_custom_call.1} parent=39 // pred_region
          %s313 = sand.u32 %s55, 1
          %s314 = scalar_lea.sflag [#allocation7], %s313
          %s315 = sand.u32 %s55, 1
          %s316 = smul.addr %s315, 8
          %s317 = scalar_lea.vmem [#allocation6], %s316
          %s319 = ssub.s32 128, 128
          %320 = vsyncadd %s314, %s319
          %s321 = sadd.s32 %s32, %s31
          %s322 = smul.addr %s321, 128
          %s323 = scalar_lea.hbm %s0, %s322
          %s325 = sshll.u32 %s317, 4
          %s326 = int_to_ptr.vmem [resolvable:$true] %s325
          %328 = dma.hbm_to_vmem [thread:$0]  %s323, 128, %s326, %s314
        $region44: #{tpu_custom_call.1} parent=39 // pred_fallthru
          _
        // Predicated region
        $region45: #{tpu_custom_call.1} parent=39 // pred_check
          %p329 = pneg %p93
        $region46: #{tpu_custom_call.1} parent=39 // pred_check_branch
          %331 = sbr.rel (%p329) target = $region48
        $region47: #{tpu_custom_call.1} parent=39 // pred_region
          %s332 = sand.u32 %s24, 1
          %s333 = scalar_lea.sflag [#allocation10], %s332
          %s334 = sand.u32 %s83, 1
          %s335 = smul.addr %s334, 8
          %s336 = scalar_lea.vmem [#allocation9], %s335
          %s338 = ssub.s32 128, 128
          %339 = vsyncadd %s333, %s338
          %s340 = sadd.s32 %s33, %s31
          %s341 = smul.addr %s340, 128
          %s342 = scalar_lea.hbm %s1, %s341
          %s344 = sshll.u32 %s336, 4
          %s345 = int_to_ptr.vmem [resolvable:$true] %s344
          %347 = dma.hbm_to_vmem [thread:$0]  %s342, 128, %s345, %s333
        $region48: #{tpu_custom_call.1} parent=39 // pred_fallthru
          _
      $region40: #{tpu_custom_call.1} parent=5 // pred_fallthru
        _
      %p348 = scmp.le.s32.totalorder 1, %s24
      %p349 = scmp.lt.s32.totalorder %s24, 3
      %p350 = pnand %p348, %p349
      %p351 = pneg %p350
      // Predicated region
      $region49: #{tpu_custom_call.1} parent=5 // pred_check
        _
      $region50: #{tpu_custom_call.1} parent=5 // pred_check_branch
        %353 = sbr.rel (%p350) target = $region52
      $region51: #{tpu_custom_call.1} parent=5 // pred_region
        %s354 = ssub.s32 %s24, 1
        %s355 = sand.u32 %s58, 1
        %s356 = scalar_lea.sflag [#allocation7], %s355
        %s357 = sand.u32 %s58, 1
        %s358 = smul.addr %s357, 8
        %s359 = scalar_lea.vmem [#allocation6], %s358
        // Predicated region
        $region53: #{tpu_custom_call.1} parent=51 // pred_check
          %p360 = pneg %p71
        $region54: #{tpu_custom_call.1} parent=51 // pred_check_branch
          %362 = sbr.rel (%p360) target = $region56
        $region55: #{tpu_custom_call.1} parent=51 // pred_region
          %363 = dma.done %s356, 128
        $region56: #{tpu_custom_call.1} parent=51 // pred_fallthru
          _
        %s364 = sand.u32 %s29, 1
        %s365 = scalar_lea.sflag [#allocation10], %s364
        %s366 = sand.u32 %s86, 1
        %s367 = smul.addr %s366, 8
        %s368 = scalar_lea.vmem [#allocation9], %s367
        // Predicated region
        $region57: #{tpu_custom_call.1} parent=51 // pred_check
          %p369 = pneg %p99
        $region58: #{tpu_custom_call.1} parent=51 // pred_check_branch
          %371 = sbr.rel (%p369) target = $region60
        $region59: #{tpu_custom_call.1} parent=51 // pred_region
          %372 = dma.done %s365, 128
        $region60: #{tpu_custom_call.1} parent=51 // pred_fallthru
          _
        // Predicated region
        $region61: #{tpu_custom_call.1} parent=51 // pred_check
          %p373 = pneg %p120
        $region62: #{tpu_custom_call.1} parent=51 // pred_check_branch
          %375 = sbr.rel (%p373) target = $region64
        $region63: #{tpu_custom_call.1} parent=51 // pred_region
          %376 = dma.done [#allocation10], 512
        $region64: #{tpu_custom_call.1} parent=51 // pred_fallthru
          _
        // Predicated region
        $region65: #{tpu_custom_call.1} parent=51 // pred_check
          %p377 = pneg %p162
        $region66: #{tpu_custom_call.1} parent=51 // pred_check_branch
          %379 = sbr.rel (%p377) target = $region68
        $region67: #{tpu_custom_call.1} parent=51 // pred_region
          %380 = dma.done [#allocation13], 512
        $region68: #{tpu_custom_call.1} parent=51 // pred_fallthru
          _
        %s381 = sand.u32 %s58, 1
        %s382 = scalar_lea.sflag [#allocation7], %s381
        %s383 = sand.u32 %s58, 1
        %s384 = smul.addr %s383, 8
        %s385 = scalar_lea.vmem [#allocation6], %s384
        %p386 = pneg %p71
        %p387 = pneg %p68
        %s388 = sand.u32 %s29, 1
        %s389 = scalar_lea.sflag [#allocation10], %s388
        %s390 = sand.u32 %s86, 1
        %s391 = smul.addr %s390, 8
        %s392 = scalar_lea.vmem [#allocation9], %s391
        %p393 = pneg %p99
        %p394 = pneg %p96
        %p395 = pneg %p120
        %p396 = pneg %p117
        %p397 = pneg %p141
        %p398 = pneg %p138
        %p399 = pneg %p162
        %p400 = pneg %p159
        %p401 = pneg %p183
        %p402 = pneg %p180
        %p403 = pneg %p204
        %p404 = pneg %p201
        %p405 = pneg %p225
        %p406 = pneg %p222
        %p407 = pneg %p253
        %p408 = pneg %p250
        %s409 = sand.u32 %s240, 1
        %s410 = scalar_lea.sflag [#allocation8], %s409
        %s411 = sand.u32 %s240, 1
        %s412 = smul.addr %s411, 8
        %s413 = scalar_lea.vmem [#allocation14], %s412
        %p414 = scmp.eq.s32.totalorder %s36, 0
        // Predicated region
        $region69: #{tpu_custom_call.1} parent=51 // pred_check
          %p415 = pneg %p414
        $region70: #{tpu_custom_call.1} parent=51 // pred_check_branch
          %417 = sbr.rel (%p415) target = $region72
        $region71: #{tpu_custom_call.1} parent=51 // pred_region
          %v418 = vld [vmem:[%s359] sm:$0xff]
          %v419 = vld [vmem:[#allocation11] sm:$0xff]
          %v420 = vld [vmem:[#allocation11 + $0x8] sm:$0xff]
          %v421 = vld [vmem:[#allocation11 + $0x10] sm:$0xff]
          %v422 = vld [vmem:[#allocation11 + $0x18] sm:$0xff]
          %v423 = vld [vmem:[%s3] sm:$0x1]
          %v425 = vlaneseq
          %v426 = vshrl.u32 %v425, 7
          %v427 = vsub.s32 0, %v426
          %v428 = vrot.slane %v423, %v427
          %vm430 = vcmask 261120
          %v432 = vsel %vm430, %v418, 0
          %434 = vmatprep.subr.mxu0 0.0
          %435 = vmatpush1.msra.mxu0 %v419
          %436 = vmatprep.subr.mxu0 0.0
          %437 = vmatpush1.msra.mxu0 %v420
          %438 = vmatprep.subr.mxu0 0.0
          %439 = vmatpush1.msra.mxu0 %v421
          %440 = vmatprep.subr.mxu0 0.0
          %441 = vmatpush1.msra.mxu0 %v422
          %442 = vmatprep.subr.mxu0 0.0
          %443 = vmatpush1.msra.mxu0 0.0
          %444 = vmatprep.subr.mxu0 0.0
          %445 = vmatpush1.msra.mxu0 0.0
          %446 = vmatprep.subr.mxu0 0.0
          %447 = vmatpush1.msra.mxu0 0.0
          %448 = vmatprep.subr.mxu0 0.0
          %449 = vmatpush1.msra.mxu0 0.0
          %450 = vmatprep.subr.mxu0 0.0
          %451 = vmatpush1.msra.mxu0 0.0
          %452 = vmatprep.subr.mxu0 0.0
          %453 = vmatpush1.msra.mxu0 0.0
          %454 = vmatprep.subr.mxu0 0.0
          %455 = vmatpush1.msra.mxu0 0.0
          %456 = vmatprep.subr.mxu0 0.0
          %457 = vmatpush1.msra.mxu0 0.0
          %458 = vmatprep.subr.mxu0 0.0
          %459 = vmatpush1.msra.mxu0 0.0
          %460 = vmatprep.subr.mxu0 0.0
          %461 = vmatpush1.msra.mxu0 0.0
          %462 = vmatprep.subr.mxu0 0.0
          %463 = vmatpush1.msra.mxu0 0.0
          %464 = vmatprep.subr.mxu0 0.0
          %465 = vmatpush1.msra.mxu0 0.0
          %466 = vmatprep.subr.mxu0 0.0
          %467 = vmatpush1.msra.mxu0 0.0
          %468 = vmatprep.subr.mxu0 0.0
          %469 = vmatpush1.msra.mxu0 0.0
          %470 = vmatprep.subr.mxu0 0.0
          %471 = vmatpush1.msra.mxu0 0.0
          %472 = vmatprep.subr.mxu0 0.0
          %473 = vmatpush1.msra.mxu0 0.0
          %474 = vmatprep.subr.mxu0 0.0
          %475 = vmatpush1.msra.mxu0 0.0
          %476 = vmatprep.subr.mxu0 0.0
          %477 = vmatpush1.msra.mxu0 0.0
          %478 = vmatprep.subr.mxu0 0.0
          %479 = vmatpush1.msra.mxu0 0.0
          %480 = vmatprep.subr.mxu0 0.0
          %481 = vmatpush1.msra.mxu0 0.0
          %482 = vmatprep.subr.mxu0 0.0
          %483 = vmatpush1.msra.mxu0 0.0
          %484 = vmatprep.subr.mxu0 0.0
          %485 = vmatpush1.msra.mxu0 0.0
          %486 = vmatprep.subr.mxu0 0.0
          %487 = vmatpush1.msra.mxu0 0.0
          %488 = vmatprep.subr.mxu0 0.0
          %489 = vmatpush1.msra.mxu0 0.0
          %490 = vmatprep.subr.mxu0 0.0
          %491 = vmatpush1.msra.mxu0 0.0
          %492 = vmatprep.subr.mxu0 0.0
          %493 = vmatpush1.msra.mxu0 0.0
          %494 = vmatprep.subr.mxu0 0.0
          %495 = vmatpush1.msra.mxu0 0.0
          %496 = vmatprep.subr.mxu0 0.0
          %497 = vmatpush1.msra.mxu0 0.0
          %498 = vmatprep.mubr.f32.mxu0 0.0
          %499 = vmatmul.mubr.f32.gmra.mrb[0].mxu0 %v432
          %v500 = vpop.f32.mrb[0].mxu0
          %v501 = vadd.f32 %v428, %v500
          %v502 = vpop.f32.mrb[0].mxu0
          %503 = vdwg.mxu0
          %504 = vst.msk [vmem:[#allocation2] sm:$0xff] %vm430, %v501
          %vm505 = vcmask 31744
          %506 = vst.msk [vmem:[#allocation3] sm:$0xff] %vm505, -inf
          %507 = vst.msk [vmem:[#allocation4] sm:$0xff] %vm505, 0.0
          %508 = vst.msk [vmem:[#allocation5] sm:$0xff] %vm430, 0.0
        $region72: #{tpu_custom_call.1} parent=51 // pred_fallthru
          _
        %v509 = vld [vmem:[%s368] sm:$0xff]
        %v510 = vld [vmem:[#allocation12] sm:$0xff]
        %v511 = vld [vmem:[#allocation12 + $0x8] sm:$0xff]
        %v512 = vld [vmem:[#allocation12 + $0x10] sm:$0xff]
        %v513 = vld [vmem:[#allocation12 + $0x18] sm:$0xff]
        %v514 = vld [vmem:[%s5] sm:$0x1]
        %v516 = vlaneseq
        %v517 = vshrl.u32 %v516, 7
        %v518 = vsub.s32 0, %v517
        %v519 = vrot.slane %v514, %v518
        %vm521 = vcmask 261120
        %v523 = vsel %vm521, %v509, 0
        %525 = vmatprep.subr.mxu0 0.0
        %526 = vmatpush1.msra.mxu0 %v510
        %527 = vmatprep.subr.mxu0 0.0
        %528 = vmatpush1.msra.mxu0 %v511
        %529 = vmatprep.subr.mxu0 0.0
        %530 = vmatpush1.msra.mxu0 %v512
        %531 = vmatprep.subr.mxu0 0.0
        %532 = vmatpush1.msra.mxu0 %v513
        %533 = vmatprep.subr.mxu0 0.0
        %534 = vmatpush1.msra.mxu0 0.0
        %535 = vmatprep.subr.mxu0 0.0
        %536 = vmatpush1.msra.mxu0 0.0
        %537 = vmatprep.subr.mxu0 0.0
        %538 = vmatpush1.msra.mxu0 0.0
        %539 = vmatprep.subr.mxu0 0.0
        %540 = vmatpush1.msra.mxu0 0.0
        %541 = vmatprep.subr.mxu0 0.0
        %542 = vmatpush1.msra.mxu0 0.0
        %543 = vmatprep.subr.mxu0 0.0
        %544 = vmatpush1.msra.mxu0 0.0
        %545 = vmatprep.subr.mxu0 0.0
        %546 = vmatpush1.msra.mxu0 0.0
        %547 = vmatprep.subr.mxu0 0.0
        %548 = vmatpush1.msra.mxu0 0.0
        %549 = vmatprep.subr.mxu0 0.0
        %550 = vmatpush1.msra.mxu0 0.0
        %551 = vmatprep.subr.mxu0 0.0
        %552 = vmatpush1.msra.mxu0 0.0
        %553 = vmatprep.subr.mxu0 0.0
        %554 = vmatpush1.msra.mxu0 0.0
        %555 = vmatprep.subr.mxu0 0.0
        %556 = vmatpush1.msra.mxu0 0.0
        %557 = vmatprep.subr.mxu0 0.0
        %558 = vmatpush1.msra.mxu0 0.0
        %559 = vmatprep.subr.mxu0 0.0
        %560 = vmatpush1.msra.mxu0 0.0
        %561 = vmatprep.subr.mxu0 0.0
        %562 = vmatpush1.msra.mxu0 0.0
        %563 = vmatprep.subr.mxu0 0.0
        %564 = vmatpush1.msra.mxu0 0.0
        %565 = vmatprep.subr.mxu0 0.0
        %566 = vmatpush1.msra.mxu0 0.0
        %567 = vmatprep.subr.mxu0 0.0
        %568 = vmatpush1.msra.mxu0 0.0
        %569 = vmatprep.subr.mxu0 0.0
        %570 = vmatpush1.msra.mxu0 0.0
        %571 = vmatprep.subr.mxu0 0.0
        %572 = vmatpush1.msra.mxu0 0.0
        %573 = vmatprep.subr.mxu0 0.0
        %574 = vmatpush1.msra.mxu0 0.0
        %575 = vmatprep.subr.mxu0 0.0
        %576 = vmatpush1.msra.mxu0 0.0
        %577 = vmatprep.subr.mxu0 0.0
        %578 = vmatpush1.msra.mxu0 0.0
        %579 = vmatprep.subr.mxu0 0.0
        %580 = vmatpush1.msra.mxu0 0.0
        %581 = vmatprep.subr.mxu0 0.0
        %582 = vmatpush1.msra.mxu0 0.0
        %583 = vmatprep.subr.mxu0 0.0
        %584 = vmatpush1.msra.mxu0 0.0
        %585 = vmatprep.subr.mxu0 0.0
        %586 = vmatpush1.msra.mxu0 0.0
        %587 = vmatprep.subr.mxu0 0.0
        %588 = vmatpush1.msra.mxu0 0.0
        %589 = vmatprep.mubr.f32.mxu0 0.0
        %590 = vmatmul.mubr.f32.gmra.mrb[0].mxu0 %v523
        %v591 = vpop.f32.mrb[0].mxu0
        %v592 = vadd.f32 %v519, %v591
        %v593 = vpop.f32.mrb[0].mxu0
        %594 = vdwg.mxu0
        %v595 = vld [vmem:[#allocation2] sm:$0xff]
        %vm596 = vcmask 64512
        %v598 = vsel %vm596, %v595, 0
        %v601 = vsel %vm596, %v592, 0
        %603 = vmatprep.subr.mxu0 0.0
        %604 = vmatpush1.xpose.msra.mxu0 %v601
        %605 = vmatprep.subr.mxu0 0.0
        %606 = vmatpush1.xpose.msra.mxu0 0.0
        %607 = vmatprep.subr.mxu0 0.0
        %608 = vmatpush1.xpose.msra.mxu0 0.0
        %609 = vmatprep.subr.mxu0 0.0
        %610 = vmatpush1.xpose.msra.mxu0 0.0
        %611 = vmatprep.subr.mxu0 0.0
        %612 = vmatpush1.xpose.msra.mxu0 0.0
        %613 = vmatprep.subr.mxu0 0.0
        %614 = vmatpush1.xpose.msra.mxu0 0.0
        %615 = vmatprep.subr.mxu0 0.0
        %616 = vmatpush1.xpose.msra.mxu0 0.0
        %617 = vmatprep.subr.mxu0 0.0
        %618 = vmatpush1.xpose.msra.mxu0 0.0
        %619 = vmatprep.subr.mxu0 0.0
        %620 = vmatpush1.xpose.msra.mxu0 0.0
        %621 = vmatprep.subr.mxu0 0.0
        %622 = vmatpush1.xpose.msra.mxu0 0.0
        %623 = vmatprep.subr.mxu0 0.0
        %624 = vmatpush1.xpose.msra.mxu0 0.0
        %625 = vmatprep.subr.mxu0 0.0
        %626 = vmatpush1.xpose.msra.mxu0 0.0
        %627 = vmatprep.subr.mxu0 0.0
        %628 = vmatpush1.xpose.msra.mxu0 0.0
        %629 = vmatprep.subr.mxu0 0.0
        %630 = vmatpush1.xpose.msra.mxu0 0.0
        %631 = vmatprep.subr.mxu0 0.0
        %632 = vmatpush1.xpose.msra.mxu0 0.0
        %633 = vmatprep.subr.mxu0 0.0
        %634 = vmatpush1.xpose.msra.mxu0 0.0
        %635 = vmatprep.subr.mxu0 0.0
        %636 = vmatpush1.xpose.msra.mxu0 0.0
        %637 = vmatprep.subr.mxu0 0.0
        %638 = vmatpush1.xpose.msra.mxu0 0.0
        %639 = vmatprep.subr.mxu0 0.0
        %640 = vmatpush1.xpose.msra.mxu0 0.0
        %641 = vmatprep.subr.mxu0 0.0
        %642 = vmatpush1.xpose.msra.mxu0 0.0
        %643 = vmatprep.subr.mxu0 0.0
        %644 = vmatpush1.xpose.msra.mxu0 0.0
        %645 = vmatprep.subr.mxu0 0.0
        %646 = vmatpush1.xpose.msra.mxu0 0.0
        %647 = vmatprep.subr.mxu0 0.0
        %648 = vmatpush1.xpose.msra.mxu0 0.0
        %649 = vmatprep.subr.mxu0 0.0
        %650 = vmatpush1.xpose.msra.mxu0 0.0
        %651 = vmatprep.subr.mxu0 0.0
        %652 = vmatpush1.xpose.msra.mxu0 0.0
        %653 = vmatprep.subr.mxu0 0.0
        %654 = vmatpush1.xpose.msra.mxu0 0.0
        %655 = vmatprep.subr.mxu0 0.0
        %656 = vmatpush1.xpose.msra.mxu0 0.0
        %657 = vmatprep.subr.mxu0 0.0
        %658 = vmatpush1.xpose.msra.mxu0 0.0
        %659 = vmatprep.subr.mxu0 0.0
        %660 = vmatpush1.xpose.msra.mxu0 0.0
        %661 = vmatprep.subr.mxu0 0.0
        %662 = vmatpush1.xpose.msra.mxu0 0.0
        %663 = vmatprep.subr.mxu0 0.0
        %664 = vmatpush1.xpose.msra.mxu0 0.0
        %665 = vmatprep.subr.mxu0 0.0
        %666 = vmatpush1.xpose.msra.mxu0 0.0
        %667 = vmatprep.mubr.f32.mxu0 0.0
        %668 = vmatmul.mubr.f32.gmra.mrb[0].mxu0 %v598
        %v669 = vpop.f32.mrb[0].mxu0
        %v670 = vadd.f32 0.0, %v669
        %v671 = vpop.f32.mrb[0].mxu0
        %672 = vdwg.mxu0
        %v673 = vld [vmem:[#allocation3] sm:$0xff]
        %v674 = vsel %vm596, %v670, -inf
        %675 = vmax.xlane.f32.xlu0 %v674
        %v676 = vpop.xlane.xlu0 %675
        %v677 = vmax.f32 %v673, %v676
        %v678 = vsub.f32 %v673, %v677
        %v679 = vmul.f32 %v678, 1.442695
        %v680 = vpow.pop %v679
        %682 = vset.pattern.permute.xlu0 0
        %683 = vperm.xlu0 %682, %v677
        %v684 = vpop.permute.xlu0 %683
        %v686 = vsub.f32 %v670, %v684
        %v687 = vmul.f32 %v686, 1.442695
        %v688 = vpow.pop %v687
        %v689 = vld [vmem:[#allocation4] sm:$0xff]
        %v690 = vmul.f32 %v680, %v689
        %v691 = vsel %vm596, %v688, 0.0
        %692 = vadd.xlane.f32.xlu0 %v691
        %v693 = vpop.xlane.xlu0 %692
        %v694 = vadd.f32 %v690, %v693
        %vm695 = vcmask 7168
        %696 = vst.msk [vmem:[#allocation4] sm:$0xff] %vm695, %v694
        %697 = vrot.lane.b32.xlu0 %v592, 96
        %v698 = vpop.permute.xlu0 %697
        %v701 = vsel %vm596, %v688, 0
        %703 = vmatprep.subr.mxu0 0.0
        %704 = vmatpush1.msra.mxu0 %v698
        %705 = vmatprep.subr.mxu0 0.0
        %706 = vmatpush1.msra.mxu0 0.0
        %707 = vmatprep.subr.mxu0 0.0
        %708 = vmatpush1.msra.mxu0 0.0
        %709 = vmatprep.subr.mxu0 0.0
        %710 = vmatpush1.msra.mxu0 0.0
        %711 = vmatprep.subr.mxu0 0.0
        %712 = vmatpush1.msra.mxu0 0.0
        %713 = vmatprep.subr.mxu0 0.0
        %714 = vmatpush1.msra.mxu0 0.0
        %715 = vmatprep.subr.mxu0 0.0
        %716 = vmatpush1.msra.mxu0 0.0
        %717 = vmatprep.subr.mxu0 0.0
        %718 = vmatpush1.msra.mxu0 0.0
        %719 = vmatprep.subr.mxu0 0.0
        %720 = vmatpush1.msra.mxu0 0.0
        %721 = vmatprep.subr.mxu0 0.0
        %722 = vmatpush1.msra.mxu0 0.0
        %723 = vmatprep.subr.mxu0 0.0
        %724 = vmatpush1.msra.mxu0 0.0
        %725 = vmatprep.subr.mxu0 0.0
        %726 = vmatpush1.msra.mxu0 0.0
        %727 = vmatprep.subr.mxu0 0.0
        %728 = vmatpush1.msra.mxu0 0.0
        %729 = vmatprep.subr.mxu0 0.0
        %730 = vmatpush1.msra.mxu0 0.0
        %731 = vmatprep.subr.mxu0 0.0
        %732 = vmatpush1.msra.mxu0 0.0
        %733 = vmatprep.subr.mxu0 0.0
        %734 = vmatpush1.msra.mxu0 0.0
        %735 = vmatprep.subr.mxu0 0.0
        %736 = vmatpush1.msra.mxu0 0.0
        %737 = vmatprep.subr.mxu0 0.0
        %738 = vmatpush1.msra.mxu0 0.0
        %739 = vmatprep.subr.mxu0 0.0
        %740 = vmatpush1.msra.mxu0 0.0
        %741 = vmatprep.subr.mxu0 0.0
        %742 = vmatpush1.msra.mxu0 0.0
        %743 = vmatprep.subr.mxu0 0.0
        %744 = vmatpush1.msra.mxu0 0.0
        %745 = vmatprep.subr.mxu0 0.0
        %746 = vmatpush1.msra.mxu0 0.0
        %747 = vmatprep.subr.mxu0 0.0
        %748 = vmatpush1.msra.mxu0 0.0
        %749 = vmatprep.subr.mxu0 0.0
        %750 = vmatpush1.msra.mxu0 0.0
        %751 = vmatprep.subr.mxu0 0.0
        %752 = vmatpush1.msra.mxu0 0.0
        %753 = vmatprep.subr.mxu0 0.0
        %754 = vmatpush1.msra.mxu0 0.0
        %755 = vmatprep.subr.mxu0 0.0
        %756 = vmatpush1.msra.mxu0 0.0
        %757 = vmatprep.subr.mxu0 0.0
        %758 = vmatpush1.msra.mxu0 0.0
        %759 = vmatprep.subr.mxu0 0.0
        %760 = vmatpush1.msra.mxu0 0.0
        %761 = vmatprep.subr.mxu0 0.0
        %762 = vmatpush1.msra.mxu0 0.0
        %763 = vmatprep.subr.mxu0 0.0
        %764 = vmatpush1.msra.mxu0 0.0
        %765 = vmatprep.subr.mxu0 0.0
        %766 = vmatpush1.msra.mxu0 0.0
        %767 = vmatprep.mubr.f32.mxu0 0.0
        %768 = vmatmul.mubr.f32.gmra.mrb[0].mxu0 %v701
        %v769 = vpop.f32.mrb[0].mxu0
        %v770 = vadd.f32 0.0, %v769
        %v771 = vpop.f32.mrb[0].mxu0
        %772 = vdwg.mxu0
        %v773 = vld [vmem:[#allocation5] sm:$0xff]
        %775 = vset.pattern.permute.xlu0 0
        %776 = vperm.xlu0 %775, %v680
        %v777 = vpop.permute.xlu0 %776
        %v779 = vmul.f32 %v777, %v773
        %v780 = vadd.f32 %v779, %v770
        %781 = vst.msk [vmem:[#allocation5] sm:$0xff] %vm596, %v780
        %782 = vst.msk [vmem:[#allocation3] sm:$0xff] %vm695, %v677
        %783 = vrot.lane.b32.xlu0 %v595, 120
        %v784 = vpop.permute.xlu0 %783
        %785 = vrot.lane.b32.xlu0 %v592, 120
        %v786 = vpop.permute.xlu0 %785
        %v787 = vsel %vm596, %v784, 0
        %v789 = vsel %vm596, %v786, 0
        %791 = vmatprep.subr.mxu0 0.0
        %792 = vmatpush1.xpose.msra.mxu0 %v789
        %793 = vmatprep.subr.mxu0 0.0
        %794 = vmatpush1.xpose.msra.mxu0 0.0
        %795 = vmatprep.subr.mxu0 0.0
        %796 = vmatpush1.xpose.msra.mxu0 0.0
        %797 = vmatprep.subr.mxu0 0.0
        %798 = vmatpush1.xpose.msra.mxu0 0.0
        %799 = vmatprep.subr.mxu0 0.0
        %800 = vmatpush1.xpose.msra.mxu0 0.0
        %801 = vmatprep.subr.mxu0 0.0
        %802 = vmatpush1.xpose.msra.mxu0 0.0
        %803 = vmatprep.subr.mxu0 0.0
        %804 = vmatpush1.xpose.msra.mxu0 0.0
        %805 = vmatprep.subr.mxu0 0.0
        %806 = vmatpush1.xpose.msra.mxu0 0.0
        %807 = vmatprep.subr.mxu0 0.0
        %808 = vmatpush1.xpose.msra.mxu0 0.0
        %809 = vmatprep.subr.mxu0 0.0
        %810 = vmatpush1.xpose.msra.mxu0 0.0
        %811 = vmatprep.subr.mxu0 0.0
        %812 = vmatpush1.xpose.msra.mxu0 0.0
        %813 = vmatprep.subr.mxu0 0.0
        %814 = vmatpush1.xpose.msra.mxu0 0.0
        %815 = vmatprep.subr.mxu0 0.0
        %816 = vmatpush1.xpose.msra.mxu0 0.0
        %817 = vmatprep.subr.mxu0 0.0
        %818 = vmatpush1.xpose.msra.mxu0 0.0
        %819 = vmatprep.subr.mxu0 0.0
        %820 = vmatpush1.xpose.msra.mxu0 0.0
        %821 = vmatprep.subr.mxu0 0.0
        %822 = vmatpush1.xpose.msra.mxu0 0.0
        %823 = vmatprep.subr.mxu0 0.0
        %824 = vmatpush1.xpose.msra.mxu0 0.0
        %825 = vmatprep.subr.mxu0 0.0
        %826 = vmatpush1.xpose.msra.mxu0 0.0
        %827 = vmatprep.subr.mxu0 0.0
        %828 = vmatpush1.xpose.msra.mxu0 0.0
        %829 = vmatprep.subr.mxu0 0.0
        %830 = vmatpush1.xpose.msra.mxu0 0.0
        %831 = vmatprep.subr.mxu0 0.0
        %832 = vmatpush1.xpose.msra.mxu0 0.0
        %833 = vmatprep.subr.mxu0 0.0
        %834 = vmatpush1.xpose.msra.mxu0 0.0
        %835 = vmatprep.subr.mxu0 0.0
        %836 = vmatpush1.xpose.msra.mxu0 0.0
        %837 = vmatprep.subr.mxu0 0.0
        %838 = vmatpush1.xpose.msra.mxu0 0.0
        %839 = vmatprep.subr.mxu0 0.0
        %840 = vmatpush1.xpose.msra.mxu0 0.0
        %841 = vmatprep.subr.mxu0 0.0
        %842 = vmatpush1.xpose.msra.mxu0 0.0
        %843 = vmatprep.subr.mxu0 0.0
        %844 = vmatpush1.xpose.msra.mxu0 0.0
        %845 = vmatprep.subr.mxu0 0.0
        %846 = vmatpush1.xpose.msra.mxu0 0.0
        %847 = vmatprep.subr.mxu0 0.0
        %848 = vmatpush1.xpose.msra.mxu0 0.0
        %849 = vmatprep.subr.mxu0 0.0
        %850 = vmatpush1.xpose.msra.mxu0 0.0
        %851 = vmatprep.subr.mxu0 0.0
        %852 = vmatpush1.xpose.msra.mxu0 0.0
        %853 = vmatprep.subr.mxu0 0.0
        %854 = vmatpush1.xpose.msra.mxu0 0.0
        %855 = vmatprep.mubr.f32.mxu0 0.0
        %856 = vmatmul.mubr.f32.gmra.mrb[0].mxu0 %v787
        %v857 = vpop.f32.mrb[0].mxu0
        %v858 = vadd.f32 0.0, %v857
        %v859 = vpop.f32.mrb[0].mxu0
        %860 = vdwg.mxu0
        %v861 = vld [vmem:[#allocation3] sm:$0xff]
        %v862 = vsel %vm596, %v858, -inf
        %863 = vmax.xlane.f32.xlu0 %v862
        %v864 = vpop.xlane.xlu0 %863
        %v865 = vmax.f32 %v861, %v864
        %v866 = vsub.f32 %v861, %v865
        %v867 = vmul.f32 %v866, 1.442695
        %v868 = vpow.pop %v867
        %870 = vset.pattern.permute.xlu0 1
        %871 = vperm.xlu0 %870, %v865
        %v872 = vpop.permute.xlu0 %871
        %v874 = vsub.f32 %v858, %v872
        %v875 = vmul.f32 %v874, 1.442695
        %v876 = vpow.pop %v875
        %v877 = vld [vmem:[#allocation4] sm:$0xff]
        %v878 = vmul.f32 %v868, %v877
        %v879 = vsel %vm596, %v876, 0.0
        %880 = vadd.xlane.f32.xlu0 %v879
        %v881 = vpop.xlane.xlu0 %880
        %v882 = vadd.f32 %v878, %v881
        %vm883 = vcmask 15368
        %884 = vst.msk [vmem:[#allocation4] sm:$0xff] %vm883, %v882
        %885 = vrot.lane.b32.xlu0 %v592, 88
        %v886 = vpop.permute.xlu0 %885
        %v889 = vsel %vm596, %v876, 0
        %891 = vmatprep.subr.mxu0 0.0
        %892 = vmatpush1.msra.mxu0 %v886
        %893 = vmatprep.subr.mxu0 0.0
        %894 = vmatpush1.msra.mxu0 0.0
        %895 = vmatprep.subr.mxu0 0.0
        %896 = vmatpush1.msra.mxu0 0.0
        %897 = vmatprep.subr.mxu0 0.0
        %898 = vmatpush1.msra.mxu0 0.0
        %899 = vmatprep.subr.mxu0 0.0
        %900 = vmatpush1.msra.mxu0 0.0
        %901 = vmatprep.subr.mxu0 0.0
        %902 = vmatpush1.msra.mxu0 0.0
        %903 = vmatprep.subr.mxu0 0.0
        %904 = vmatpush1.msra.mxu0 0.0
        %905 = vmatprep.subr.mxu0 0.0
        %906 = vmatpush1.msra.mxu0 0.0
        %907 = vmatprep.subr.mxu0 0.0
        %908 = vmatpush1.msra.mxu0 0.0
        %909 = vmatprep.subr.mxu0 0.0
        %910 = vmatpush1.msra.mxu0 0.0
        %911 = vmatprep.subr.mxu0 0.0
        %912 = vmatpush1.msra.mxu0 0.0
        %913 = vmatprep.subr.mxu0 0.0
        %914 = vmatpush1.msra.mxu0 0.0
        %915 = vmatprep.subr.mxu0 0.0
        %916 = vmatpush1.msra.mxu0 0.0
        %917 = vmatprep.subr.mxu0 0.0
        %918 = vmatpush1.msra.mxu0 0.0
        %919 = vmatprep.subr.mxu0 0.0
        %920 = vmatpush1.msra.mxu0 0.0
        %921 = vmatprep.subr.mxu0 0.0
        %922 = vmatpush1.msra.mxu0 0.0
        %923 = vmatprep.subr.mxu0 0.0
        %924 = vmatpush1.msra.mxu0 0.0
        %925 = vmatprep.subr.mxu0 0.0
        %926 = vmatpush1.msra.mxu0 0.0
        %927 = vmatprep.subr.mxu0 0.0
        %928 = vmatpush1.msra.mxu0 0.0
        %929 = vmatprep.subr.mxu0 0.0
        %930 = vmatpush1.msra.mxu0 0.0
        %931 = vmatprep.subr.mxu0 0.0
        %932 = vmatpush1.msra.mxu0 0.0
        %933 = vmatprep.subr.mxu0 0.0
        %934 = vmatpush1.msra.mxu0 0.0
        %935 = vmatprep.subr.mxu0 0.0
        %936 = vmatpush1.msra.mxu0 0.0
        %937 = vmatprep.subr.mxu0 0.0
        %938 = vmatpush1.msra.mxu0 0.0
        %939 = vmatprep.subr.mxu0 0.0
        %940 = vmatpush1.msra.mxu0 0.0
        %941 = vmatprep.subr.mxu0 0.0
        %942 = vmatpush1.msra.mxu0 0.0
        %943 = vmatprep.subr.mxu0 0.0
        %944 = vmatpush1.msra.mxu0 0.0
        %945 = vmatprep.subr.mxu0 0.0
        %946 = vmatpush1.msra.mxu0 0.0
        %947 = vmatprep.subr.mxu0 0.0
        %948 = vmatpush1.msra.mxu0 0.0
        %949 = vmatprep.subr.mxu0 0.0
        %950 = vmatpush1.msra.mxu0 0.0
        %951 = vmatprep.subr.mxu0 0.0
        %952 = vmatpush1.msra.mxu0 0.0
        %953 = vmatprep.subr.mxu0 0.0
        %954 = vmatpush1.msra.mxu0 0.0
        %955 = vmatprep.mubr.f32.mxu0 0.0
        %956 = vmatmul.mubr.f32.gmra.mrb[0].mxu0 %v889
        %v957 = vpop.f32.mrb[0].mxu0
        %v958 = vadd.f32 0.0, %v957
        %v959 = vpop.f32.mrb[0].mxu0
        %960 = vdwg.mxu0
        %v961 = vld [vmem:[#allocation5] sm:$0xff]
        %963 = vset.pattern.permute.xlu0 1
        %964 = vperm.xlu0 %963, %v868
        %v965 = vpop.permute.xlu0 %964
        %v967 = vmul.f32 %v965, %v961
        %969 = vrot.lane.b32.xlu0 %v958, 8
        %v970 = vpop.permute.xlu0 %969
        %v972 = vadd.f32 %v967, %v970
        %vm973 = vcmask 130112
        %974 = vst.msk [vmem:[#allocation5] sm:$0xff] %vm973, %v972
        %975 = vst.msk [vmem:[#allocation3] sm:$0xff] %vm883, %v865
        %976 = vrot.lane.b32.xlu0 %v595, 112
        %v977 = vpop.permute.xlu0 %976
        %978 = vrot.lane.b32.xlu0 %v592, 112
        %v979 = vpop.permute.xlu0 %978
        %v980 = vsel %vm596, %v977, 0
        %v982 = vsel %vm596, %v979, 0
        %984 = vmatprep.subr.mxu0 0.0
        %985 = vmatpush1.xpose.msra.mxu0 %v982
        %986 = vmatprep.subr.mxu0 0.0
        %987 = vmatpush1.xpose.msra.mxu0 0.0
        %988 = vmatprep.subr.mxu0 0.0
        %989 = vmatpush1.xpose.msra.mxu0 0.0
        %990 = vmatprep.subr.mxu0 0.0
        %991 = vmatpush1.xpose.msra.mxu0 0.0
        %992 = vmatprep.subr.mxu0 0.0
        %993 = vmatpush1.xpose.msra.mxu0 0.0
        %994 = vmatprep.subr.mxu0 0.0
        %995 = vmatpush1.xpose.msra.mxu0 0.0
        %996 = vmatprep.subr.mxu0 0.0
        %997 = vmatpush1.xpose.msra.mxu0 0.0
        %998 = vmatprep.subr.mxu0 0.0
        %999 = vmatpush1.xpose.msra.mxu0 0.0
        %1000 = vmatprep.subr.mxu0 0.0
        %1001 = vmatpush1.xpose.msra.mxu0 0.0
        %1002 = vmatprep.subr.mxu0 0.0
        %1003 = vmatpush1.xpose.msra.mxu0 0.0
        %1004 = vmatprep.subr.mxu0 0.0
        %1005 = vmatpush1.xpose.msra.mxu0 0.0
        %1006 = vmatprep.subr.mxu0 0.0
        %1007 = vmatpush1.xpose.msra.mxu0 0.0
        %1008 = vmatprep.subr.mxu0 0.0
        %1009 = vmatpush1.xpose.msra.mxu0 0.0
        %1010 = vmatprep.subr.mxu0 0.0
        %1011 = vmatpush1.xpose.msra.mxu0 0.0
        %1012 = vmatprep.subr.mxu0 0.0
        %1013 = vmatpush1.xpose.msra.mxu0 0.0
        %1014 = vmatprep.subr.mxu0 0.0
        %1015 = vmatpush1.xpose.msra.mxu0 0.0
        %1016 = vmatprep.subr.mxu0 0.0
        %1017 = vmatpush1.xpose.msra.mxu0 0.0
        %1018 = vmatprep.subr.mxu0 0.0
        %1019 = vmatpush1.xpose.msra.mxu0 0.0
        %1020 = vmatprep.subr.mxu0 0.0
        %1021 = vmatpush1.xpose.msra.mxu0 0.0
        %1022 = vmatprep.subr.mxu0 0.0
        %1023 = vmatpush1.xpose.msra.mxu0 0.0
        %1024 = vmatprep.subr.mxu0 0.0
        %1025 = vmatpush1.xpose.msra.mxu0 0.0
        %1026 = vmatprep.subr.mxu0 0.0
        %1027 = vmatpush1.xpose.msra.mxu0 0.0
        %1028 = vmatprep.subr.mxu0 0.0
        %1029 = vmatpush1.xpose.msra.mxu0 0.0
        %1030 = vmatprep.subr.mxu0 0.0
        %1031 = vmatpush1.xpose.msra.mxu0 0.0
        %1032 = vmatprep.subr.mxu0 0.0
        %1033 = vmatpush1.xpose.msra.mxu0 0.0
        %1034 = vmatprep.subr.mxu0 0.0
        %1035 = vmatpush1.xpose.msra.mxu0 0.0
        %1036 = vmatprep.subr.mxu0 0.0
        %1037 = vmatpush1.xpose.msra.mxu0 0.0
        %1038 = vmatprep.subr.mxu0 0.0
        %1039 = vmatpush1.xpose.msra.mxu0 0.0
        %1040 = vmatprep.subr.mxu0 0.0
        %1041 = vmatpush1.xpose.msra.mxu0 0.0
        %1042 = vmatprep.subr.mxu0 0.0
        %1043 = vmatpush1.xpose.msra.mxu0 0.0
        %1044 = vmatprep.subr.mxu0 0.0
        %1045 = vmatpush1.xpose.msra.mxu0 0.0
        %1046 = vmatprep.subr.mxu0 0.0
        %1047 = vmatpush1.xpose.msra.mxu0 0.0
        %1048 = vmatprep.mubr.f32.mxu0 0.0
        %1049 = vmatmul.mubr.f32.gmra.mrb[0].mxu0 %v980
        %v1050 = vpop.f32.mrb[0].mxu0
        %v1051 = vadd.f32 0.0, %v1050
        %v1052 = vpop.f32.mrb[0].mxu0
        %1053 = vdwg.mxu0
        %v1054 = vld [vmem:[#allocation3] sm:$0xff]
        %v1055 = vsel %vm596, %v1051, -inf
        %1056 = vmax.xlane.f32.xlu0 %v1055
        %v1057 = vpop.xlane.xlu0 %1056
        %v1058 = vmax.f32 %v1054, %v1057
        %v1059 = vsub.f32 %v1054, %v1058
        %v1060 = vmul.f32 %v1059, 1.442695
        %v1061 = vpow.pop %v1060
        %1063 = vset.pattern.permute.xlu0 2
        %1064 = vperm.xlu0 %1063, %v1058
        %v1065 = vpop.permute.xlu0 %1064
        %v1067 = vsub.f32 %v1051, %v1065
        %v1068 = vmul.f32 %v1067, 1.442695
        %v1069 = vpow.pop %v1068
        %v1070 = vld [vmem:[#allocation4] sm:$0xff]
        %v1071 = vmul.f32 %v1061, %v1070
        %v1072 = vsel %vm596, %v1069, 0.0
        %1073 = vadd.xlane.f32.xlu0 %v1072
        %v1074 = vpop.xlane.xlu0 %1073
        %v1075 = vadd.f32 %v1071, %v1074
        %vm1076 = vcmask 23568
        %1077 = vst.msk [vmem:[#allocation4] sm:$0xff] %vm1076, %v1075
        %1078 = vrot.lane.b32.xlu0 %v592, 80
        %v1079 = vpop.permute.xlu0 %1078
        %v1082 = vsel %vm596, %v1069, 0
        %1084 = vmatprep.subr.mxu0 0.0
        %1085 = vmatpush1.msra.mxu0 %v1079
        %1086 = vmatprep.subr.mxu0 0.0
        %1087 = vmatpush1.msra.mxu0 0.0
        %1088 = vmatprep.subr.mxu0 0.0
        %1089 = vmatpush1.msra.mxu0 0.0
        %1090 = vmatprep.subr.mxu0 0.0
        %1091 = vmatpush1.msra.mxu0 0.0
        %1092 = vmatprep.subr.mxu0 0.0
        %1093 = vmatpush1.msra.mxu0 0.0
        %1094 = vmatprep.subr.mxu0 0.0
        %1095 = vmatpush1.msra.mxu0 0.0
        %1096 = vmatprep.subr.mxu0 0.0
        %1097 = vmatpush1.msra.mxu0 0.0
        %1098 = vmatprep.subr.mxu0 0.0
        %1099 = vmatpush1.msra.mxu0 0.0
        %1100 = vmatprep.subr.mxu0 0.0
        %1101 = vmatpush1.msra.mxu0 0.0
        %1102 = vmatprep.subr.mxu0 0.0
        %1103 = vmatpush1.msra.mxu0 0.0
        %1104 = vmatprep.subr.mxu0 0.0
        %1105 = vmatpush1.msra.mxu0 0.0
        %1106 = vmatprep.subr.mxu0 0.0
        %1107 = vmatpush1.msra.mxu0 0.0
        %1108 = vmatprep.subr.mxu0 0.0
        %1109 = vmatpush1.msra.mxu0 0.0
        %1110 = vmatprep.subr.mxu0 0.0
        %1111 = vmatpush1.msra.mxu0 0.0
        %1112 = vmatprep.subr.mxu0 0.0
        %1113 = vmatpush1.msra.mxu0 0.0
        %1114 = vmatprep.subr.mxu0 0.0
        %1115 = vmatpush1.msra.mxu0 0.0
        %1116 = vmatprep.subr.mxu0 0.0
        %1117 = vmatpush1.msra.mxu0 0.0
        %1118 = vmatprep.subr.mxu0 0.0
        %1119 = vmatpush1.msra.mxu0 0.0
        %1120 = vmatprep.subr.mxu0 0.0
        %1121 = vmatpush1.msra.mxu0 0.0
        %1122 = vmatprep.subr.mxu0 0.0
        %1123 = vmatpush1.msra.mxu0 0.0
        %1124 = vmatprep.subr.mxu0 0.0
        %1125 = vmatpush1.msra.mxu0 0.0
        %1126 = vmatprep.subr.mxu0 0.0
        %1127 = vmatpush1.msra.mxu0 0.0
        %1128 = vmatprep.subr.mxu0 0.0
        %1129 = vmatpush1.msra.mxu0 0.0
        %1130 = vmatprep.subr.mxu0 0.0
        %1131 = vmatpush1.msra.mxu0 0.0
        %1132 = vmatprep.subr.mxu0 0.0
        %1133 = vmatpush1.msra.mxu0 0.0
        %1134 = vmatprep.subr.mxu0 0.0
        %1135 = vmatpush1.msra.mxu0 0.0
        %1136 = vmatprep.subr.mxu0 0.0
        %1137 = vmatpush1.msra.mxu0 0.0
        %1138 = vmatprep.subr.mxu0 0.0
        %1139 = vmatpush1.msra.mxu0 0.0
        %1140 = vmatprep.subr.mxu0 0.0
        %1141 = vmatpush1.msra.mxu0 0.0
        %1142 = vmatprep.subr.mxu0 0.0
        %1143 = vmatpush1.msra.mxu0 0.0
        %1144 = vmatprep.subr.mxu0 0.0
        %1145 = vmatpush1.msra.mxu0 0.0
        %1146 = vmatprep.subr.mxu0 0.0
        %1147 = vmatpush1.msra.mxu0 0.0
        %1148 = vmatprep.mubr.f32.mxu0 0.0
        %1149 = vmatmul.mubr.f32.gmra.mrb[0].mxu0 %v1082
        %v1150 = vpop.f32.mrb[0].mxu0
        %v1151 = vadd.f32 0.0, %v1150
        %v1152 = vpop.f32.mrb[0].mxu0
        %1153 = vdwg.mxu0
        %v1154 = vld [vmem:[#allocation5] sm:$0xff]
        %1156 = vset.pattern.permute.xlu0 2
        %1157 = vperm.xlu0 %1156, %v1061
        %v1158 = vpop.permute.xlu0 %1157
        %v1160 = vmul.f32 %v1158, %v1154
        %1162 = vrot.lane.b32.xlu0 %v1151, 16
        %v1163 = vpop.permute.xlu0 %1162
        %v1165 = vadd.f32 %v1160, %v1163
        %vm1166 = vcmask 195712
        %1167 = vst.msk [vmem:[#allocation5] sm:$0xff] %vm1166, %v1165
        %1168 = vst.msk [vmem:[#allocation3] sm:$0xff] %vm1076, %v1058
        %1169 = vrot.lane.b32.xlu0 %v595, 104
        %v1170 = vpop.permute.xlu0 %1169
        %1171 = vrot.lane.b32.xlu0 %v592, 104
        %v1172 = vpop.permute.xlu0 %1171
        %v1173 = vsel %vm596, %v1170, 0
        %v1175 = vsel %vm596, %v1172, 0
        %1177 = vmatprep.subr.mxu0 0.0
        %1178 = vmatpush1.xpose.msra.mxu0 %v1175
        %1179 = vmatprep.subr.mxu0 0.0
        %1180 = vmatpush1.xpose.msra.mxu0 0.0
        %1181 = vmatprep.subr.mxu0 0.0
        %1182 = vmatpush1.xpose.msra.mxu0 0.0
        %1183 = vmatprep.subr.mxu0 0.0
        %1184 = vmatpush1.xpose.msra.mxu0 0.0
        %1185 = vmatprep.subr.mxu0 0.0
        %1186 = vmatpush1.xpose.msra.mxu0 0.0
        %1187 = vmatprep.subr.mxu0 0.0
        %1188 = vmatpush1.xpose.msra.mxu0 0.0
        %1189 = vmatprep.subr.mxu0 0.0
        %1190 = vmatpush1.xpose.msra.mxu0 0.0
        %1191 = vmatprep.subr.mxu0 0.0
        %1192 = vmatpush1.xpose.msra.mxu0 0.0
        %1193 = vmatprep.subr.mxu0 0.0
        %1194 = vmatpush1.xpose.msra.mxu0 0.0
        %1195 = vmatprep.subr.mxu0 0.0
        %1196 = vmatpush1.xpose.msra.mxu0 0.0
        %1197 = vmatprep.subr.mxu0 0.0
        %1198 = vmatpush1.xpose.msra.mxu0 0.0
        %1199 = vmatprep.subr.mxu0 0.0
        %1200 = vmatpush1.xpose.msra.mxu0 0.0
        %1201 = vmatprep.subr.mxu0 0.0
        %1202 = vmatpush1.xpose.msra.mxu0 0.0
        %1203 = vmatprep.subr.mxu0 0.0
        %1204 = vmatpush1.xpose.msra.mxu0 0.0
        %1205 = vmatprep.subr.mxu0 0.0
        %1206 = vmatpush1.xpose.msra.mxu0 0.0
        %1207 = vmatprep.subr.mxu0 0.0
        %1208 = vmatpush1.xpose.msra.mxu0 0.0
        %1209 = vmatprep.subr.mxu0 0.0
        %1210 = vmatpush1.xpose.msra.mxu0 0.0
        %1211 = vmatprep.subr.mxu0 0.0
        %1212 = vmatpush1.xpose.msra.mxu0 0.0
        %1213 = vmatprep.subr.mxu0 0.0
        %1214 = vmatpush1.xpose.msra.mxu0 0.0
        %1215 = vmatprep.subr.mxu0 0.0
        %1216 = vmatpush1.xpose.msra.mxu0 0.0
        %1217 = vmatprep.subr.mxu0 0.0
        %1218 = vmatpush1.xpose.msra.mxu0 0.0
        %1219 = vmatprep.subr.mxu0 0.0
        %1220 = vmatpush1.xpose.msra.mxu0 0.0
        %1221 = vmatprep.subr.mxu0 0.0
        %1222 = vmatpush1.xpose.msra.mxu0 0.0
        %1223 = vmatprep.subr.mxu0 0.0
        %1224 = vmatpush1.xpose.msra.mxu0 0.0
        %1225 = vmatprep.subr.mxu0 0.0
        %1226 = vmatpush1.xpose.msra.mxu0 0.0
        %1227 = vmatprep.subr.mxu0 0.0
        %1228 = vmatpush1.xpose.msra.mxu0 0.0
        %1229 = vmatprep.subr.mxu0 0.0
        %1230 = vmatpush1.xpose.msra.mxu0 0.0
        %1231 = vmatprep.subr.mxu0 0.0
        %1232 = vmatpush1.xpose.msra.mxu0 0.0
        %1233 = vmatprep.subr.mxu0 0.0
        %1234 = vmatpush1.xpose.msra.mxu0 0.0
        %1235 = vmatprep.subr.mxu0 0.0
        %1236 = vmatpush1.xpose.msra.mxu0 0.0
        %1237 = vmatprep.subr.mxu0 0.0
        %1238 = vmatpush1.xpose.msra.mxu0 0.0
        %1239 = vmatprep.subr.mxu0 0.0
        %1240 = vmatpush1.xpose.msra.mxu0 0.0
        %1241 = vmatprep.mubr.f32.mxu0 0.0
        %1242 = vmatmul.mubr.f32.gmra.mrb[0].mxu0 %v1173
        %v1243 = vpop.f32.mrb[0].mxu0
        %v1244 = vadd.f32 0.0, %v1243
        %v1245 = vpop.f32.mrb[0].mxu0
        %1246 = vdwg.mxu0
        %v1247 = vld [vmem:[#allocation3] sm:$0xff]
        %v1248 = vsel %vm596, %v1244, -inf
        %1249 = vmax.xlane.f32.xlu0 %v1248
        %v1250 = vpop.xlane.xlu0 %1249
        %v1251 = vmax.f32 %v1247, %v1250
        %v1252 = vsub.f32 %v1247, %v1251
        %v1253 = vmul.f32 %v1252, 1.442695
        %v1254 = vpow.pop %v1253
        %1256 = vset.pattern.permute.xlu0 3
        %1257 = vperm.xlu0 %1256, %v1251
        %v1258 = vpop.permute.xlu0 %1257
        %v1260 = vsub.f32 %v1244, %v1258
        %v1261 = vmul.f32 %v1260, 1.442695
        %v1262 = vpow.pop %v1261
        %v1263 = vld [vmem:[#allocation4] sm:$0xff]
        %v1264 = vmul.f32 %v1254, %v1263
        %v1265 = vsel %vm596, %v1262, 0.0
        %1266 = vadd.xlane.f32.xlu0 %v1265
        %v1267 = vpop.xlane.xlu0 %1266
        %v1268 = vadd.f32 %v1264, %v1267
        %vm1269 = vcmask 31768
        %1270 = vst.msk [vmem:[#allocation4] sm:$0xff] %vm1269, %v1268
        %1271 = vrot.lane.b32.xlu0 %v592, 72
        %v1272 = vpop.permute.xlu0 %1271
        %v1275 = vsel %vm596, %v1262, 0
        %1277 = vmatprep.subr.mxu0 0.0
        %1278 = vmatpush1.msra.mxu0 %v1272
        %1279 = vmatprep.subr.mxu0 0.0
        %1280 = vmatpush1.msra.mxu0 0.0
        %1281 = vmatprep.subr.mxu0 0.0
        %1282 = vmatpush1.msra.mxu0 0.0
        %1283 = vmatprep.subr.mxu0 0.0
        %1284 = vmatpush1.msra.mxu0 0.0
        %1285 = vmatprep.subr.mxu0 0.0
        %1286 = vmatpush1.msra.mxu0 0.0
        %1287 = vmatprep.subr.mxu0 0.0
        %1288 = vmatpush1.msra.mxu0 0.0
        %1289 = vmatprep.subr.mxu0 0.0
        %1290 = vmatpush1.msra.mxu0 0.0
        %1291 = vmatprep.subr.mxu0 0.0
        %1292 = vmatpush1.msra.mxu0 0.0
        %1293 = vmatprep.subr.mxu0 0.0
        %1294 = vmatpush1.msra.mxu0 0.0
        %1295 = vmatprep.subr.mxu0 0.0
        %1296 = vmatpush1.msra.mxu0 0.0
        %1297 = vmatprep.subr.mxu0 0.0
        %1298 = vmatpush1.msra.mxu0 0.0
        %1299 = vmatprep.subr.mxu0 0.0
        %1300 = vmatpush1.msra.mxu0 0.0
        %1301 = vmatprep.subr.mxu0 0.0
        %1302 = vmatpush1.msra.mxu0 0.0
        %1303 = vmatprep.subr.mxu0 0.0
        %1304 = vmatpush1.msra.mxu0 0.0
        %1305 = vmatprep.subr.mxu0 0.0
        %1306 = vmatpush1.msra.mxu0 0.0
        %1307 = vmatprep.subr.mxu0 0.0
        %1308 = vmatpush1.msra.mxu0 0.0
        %1309 = vmatprep.subr.mxu0 0.0
        %1310 = vmatpush1.msra.mxu0 0.0
        %1311 = vmatprep.subr.mxu0 0.0
        %1312 = vmatpush1.msra.mxu0 0.0
        %1313 = vmatprep.subr.mxu0 0.0
        %1314 = vmatpush1.msra.mxu0 0.0
        %1315 = vmatprep.subr.mxu0 0.0
        %1316 = vmatpush1.msra.mxu0 0.0
        %1317 = vmatprep.subr.mxu0 0.0
        %1318 = vmatpush1.msra.mxu0 0.0
        %1319 = vmatprep.subr.mxu0 0.0
        %1320 = vmatpush1.msra.mxu0 0.0
        %1321 = vmatprep.subr.mxu0 0.0
        %1322 = vmatpush1.msra.mxu0 0.0
        %1323 = vmatprep.subr.mxu0 0.0
        %1324 = vmatpush1.msra.mxu0 0.0
        %1325 = vmatprep.subr.mxu0 0.0
        %1326 = vmatpush1.msra.mxu0 0.0
        %1327 = vmatprep.subr.mxu0 0.0
        %1328 = vmatpush1.msra.mxu0 0.0
        %1329 = vmatprep.subr.mxu0 0.0
        %1330 = vmatpush1.msra.mxu0 0.0
        %1331 = vmatprep.subr.mxu0 0.0
        %1332 = vmatpush1.msra.mxu0 0.0
        %1333 = vmatprep.subr.mxu0 0.0
        %1334 = vmatpush1.msra.mxu0 0.0
        %1335 = vmatprep.subr.mxu0 0.0
        %1336 = vmatpush1.msra.mxu0 0.0
        %1337 = vmatprep.subr.mxu0 0.0
        %1338 = vmatpush1.msra.mxu0 0.0
        %1339 = vmatprep.subr.mxu0 0.0
        %1340 = vmatpush1.msra.mxu0 0.0
        %1341 = vmatprep.mubr.f32.mxu0 0.0
        %1342 = vmatmul.mubr.f32.gmra.mrb[0].mxu0 %v1275
        %v1343 = vpop.f32.mrb[0].mxu0
        %v1344 = vadd.f32 0.0, %v1343
        %v1345 = vpop.f32.mrb[0].mxu0
        %1346 = vdwg.mxu0
        %v1347 = vld [vmem:[#allocation5] sm:$0xff]
        %1349 = vset.pattern.permute.xlu0 3
        %1350 = vperm.xlu0 %1349, %v1254
        %v1351 = vpop.permute.xlu0 %1350
        %v1353 = vmul.f32 %v1351, %v1347
        %1355 = vrot.lane.b32.xlu0 %v1344, 24
        %v1356 = vpop.permute.xlu0 %1355
        %v1358 = vadd.f32 %v1353, %v1356
        %vm1359 = vcmask 261312
        %1360 = vst.msk [vmem:[#allocation5] sm:$0xff] %vm1359, %v1358
        %1361 = vst.msk [vmem:[#allocation3] sm:$0xff] %vm1269, %v1251
        // Predicated region
        $region73: #{tpu_custom_call.1} parent=51 // pred_check
          %p1362 = pneg %p414
        $region74: #{tpu_custom_call.1} parent=51 // pred_check_branch
          %1364 = sbr.rel (%p1362) target = $region76
        $region75: #{tpu_custom_call.1} parent=51 // pred_region
          %v1365 = vld [vmem:[#allocation4] sm:$0xff]
          %v1366 = vrcp.pop %v1365
          %v1367 = vld [vmem:[#allocation5] sm:$0xff]
          %1369 = vset.pattern.permute.xlu0 0
          %1370 = vperm.xlu0 %1369, %v1366
          %v1371 = vpop.permute.xlu0 %1370
          %v1373 = vmul.f32 %v1367, %v1371
          %1374 = vst.msk [vmem:[#allocation5] sm:$0xff] %vm596, %v1373
          %v1375 = vld [vmem:[#allocation5] sm:$0xff]
          %1376 = vset.pattern.permute.xlu0 1
          %1377 = vperm.xlu0 %1376, %v1366
          %v1378 = vpop.permute.xlu0 %1377
          %v1380 = vmul.f32 %v1375, %v1378
          %1381 = vst.msk [vmem:[#allocation5] sm:$0xff] %vm973, %v1380
          %v1382 = vld [vmem:[#allocation5] sm:$0xff]
          %1383 = vset.pattern.permute.xlu0 2
          %1384 = vperm.xlu0 %1383, %v1366
          %v1385 = vpop.permute.xlu0 %1384
          %v1387 = vmul.f32 %v1382, %v1385
          %1388 = vst.msk [vmem:[#allocation5] sm:$0xff] %vm1166, %v1387
          %v1389 = vld [vmem:[#allocation5] sm:$0xff]
          %1390 = vset.pattern.permute.xlu0 3
          %1391 = vperm.xlu0 %1390, %v1366
          %v1392 = vpop.permute.xlu0 %1391
          %v1394 = vmul.f32 %v1389, %v1392
          %1395 = vst.msk [vmem:[#allocation5] sm:$0xff] %vm1359, %v1394
          %v1396 = vld [vmem:[#allocation5] sm:$0xff]
          %v1397 = vld [vmem:[%s359] sm:$0xff]
          %v1398 = vadd.f32 %v1396, %v1397
          %v1399 = vsel %vm521, %v1398, 0.0
          %1400 = vadd.xlane.f32.xlu0 %v1399
          %v1401 = vpop.xlane.xlu0 %1400
          %v1402 = vrcp.pop 32.0
          %v1403 = vmul.f32 %v1401, %v1402
          %v1404 = vsub.f32 %v1398, %v1403
          %v1405 = vmul.f32 %v1404, %v1404
          %v1406 = vsel %vm521, %v1405, 0.0
          %1407 = vadd.xlane.f32.xlu0 %v1406
          %v1408 = vpop.xlane.xlu0 %1407
          %v1409 = vmul.f32 %v1408, %v1402
          %v1410 = vadd.f32 %v1409, 1e-05
          %v1411 = vrsqrt.pop %v1410
          %v1412 = vmul.f32 %v1404, %v1411
          %v1413 = vld [vmem:[%s6] sm:$0x1]
          %v1415 = vlaneseq
          %v1416 = vshrl.u32 %v1415, 7
          %v1417 = vsub.s32 0, %v1416
          %v1418 = vrot.slane %v1413, %v1417
          %v1420 = vmul.f32 %v1412, %v1418
          %v1421 = vld [vmem:[%s7] sm:$0x1]
          %v1423 = vlaneseq
          %v1424 = vshrl.u32 %v1423, 7
          %v1425 = vsub.s32 0, %v1424
          %v1426 = vrot.slane %v1421, %v1425
          %v1428 = vadd.f32 %v1420, %v1426
          %1429 = vst.msk [vmem:[%s413] sm:$0xff] %vm521, %v1428
        $region76: #{tpu_custom_call.1} parent=51 // pred_fallthru
          _
        %s1430 = sand.u32 %s240, 1
        %s1431 = scalar_lea.sflag [#allocation8], %s1430
        %s1432 = sand.u32 %s240, 1
        %s1433 = smul.addr %s1432, 8
        %s1434 = scalar_lea.vmem [#allocation14], %s1433
        // Predicated region
        $region77: #{tpu_custom_call.1} parent=51 // pred_check
          %p1435 = pneg %p250
        $region78: #{tpu_custom_call.1} parent=51 // pred_check_branch
          %1437 = sbr.rel (%p1435) target = $region80
        $region79: #{tpu_custom_call.1} parent=51 // pred_region
          %s1439 = ssub.s32 128, 128
          %1440 = vsyncadd %s1431, %s1439
          %s1441 = sadd.s32 %s35, %s34
          %s1442 = smul.addr %s1441, 128
          %s1443 = scalar_lea.hbm %s8, %s1442
          %s1445 = sshll.u32 %s1434, 4
          %s1446 = int_to_ptr.vmem [resolvable:$true] %s1445
          %1448 = dma.vmem_to_hbm [thread:$0]  %s1446, 128, %s1443, %s1431
        $region80: #{tpu_custom_call.1} parent=51 // pred_fallthru
          _
      $region52: #{tpu_custom_call.1} parent=5 // pred_fallthru
        _
      %p1449 = scmp.le.s32.totalorder 2, %s24
      // Predicated region
      $region81: #{tpu_custom_call.1} parent=5 // pred_check
        %p1450 = pneg %p1449
      $region82: #{tpu_custom_call.1} parent=5 // pred_check_branch
        %1452 = sbr.rel (%p1450) target = $region84
      $region83: #{tpu_custom_call.1} parent=5 // pred_region
        %s1453 = ssub.s32 %s24, 2
        // Predicated region
        $region85: #{tpu_custom_call.1} parent=83 // pred_check
          %p1454 = pneg %p256
        $region86: #{tpu_custom_call.1} parent=83 // pred_check_branch
          %1456 = sbr.rel (%p1454) target = $region88
        $region87: #{tpu_custom_call.1} parent=83 // pred_region
          %s1457 = sand.u32 %s241, 1
          %s1458 = scalar_lea.sflag [#allocation8], %s1457
          %s1459 = sand.u32 %s241, 1
          %s1460 = smul.addr %s1459, 8
          %s1461 = scalar_lea.vmem [#allocation14], %s1460
          %1462 = dma.done %s1458, 128
        $region88: #{tpu_custom_call.1} parent=83 // pred_fallthru
          _
      $region84: #{tpu_custom_call.1} parent=5 // pred_fallthru
        _
    $region6: #{tpu_custom_call.1} parent=1 // loop_footer
      %s28 = sadd.s32 1, %s24
    $region7: #{tpu_custom_call.1} parent=1 // loop_footer_branch
      %23 = sbr.rel target = $region3
    $region8: #{tpu_custom_call.1} parent=1 // loop_exit
      _
    %1463 = vsyncpa [#allocation7], 1
    %s1464 = scalar_lea.sflag [#allocation7], 1
    %1465 = vsyncpa %s1464, 1
    %1466 = vsyncpa [#allocation10], 1
    %s1467 = scalar_lea.sflag [#allocation10], 1
    %1468 = vsyncpa %s1467, 1
    %1469 = vsyncpa [#allocation13], 1
    %1470 = vsyncpa [#allocation8], 1
    %s1471 = scalar_lea.sflag [#allocation8], 1
    %1472 = vsyncpa %s1471, 1

</llo_original>
